<compile_context>
chip_gen: v5e
topology: v5e:2x2
jax: 0.10.0
libtpu: 0.0.40
codegen_flags: <defaults>
</compile_context>

<pallas_src>
import functools

import jax
import jax.numpy as jnp
from jax import lax
from jax.experimental import pallas as pl
from jax.experimental.pallas import tpu as pltpu


def _round_up(x, m):
    return ((x + m - 1) // m) * m


def _vmem_capacity_bytes():
    """Physical VMEM of the attached TPU, with a conservative fallback."""
    try:
        info = pltpu.get_tpu_info()
        cap = getattr(info, "vmem_capacity_bytes", None)
        if cap:
            return int(cap)
    except Exception:
        pass
    return 64 * 2**20  # v7x-sized fallback (smallest current generation)


# --------------------------------------------------------------------- fused layer

def _fused_layer_kernel(a_ref, u_ref, ci_ref, su_ref, si_ref,
                        nu_ref, sou_ref, ni_ref, soi_ref, *, tk, scale):
    """One (row-tile, k-tile) step of a full GCN layer on the bipartite block R.

    Grid = (Mp//tm, Kp//tk), k fastest.  nu_ref (user rows) is k-resident and used as
    the reduction accumulator; ni_ref (items) has a constant block index, so it stays
    resident across the whole grid and accumulates over the row tiles.
    """
    gi = pl.program_id(0)
    gk = pl.program_id(1)

    @pl.when((gi == 0) & (gk == 0))
    def _():
        ni_ref[...] = jnp.zeros_like(ni_ref)

    @pl.when(gk == 0)
    def _():
        nu_ref[...] = jnp.zeros_like(nu_ref)

    a = a_ref[...]                                        # (tm, tk) bf16 adjacency tile
    off = pl.multiple_of(gk * tk, tk)

    # user half: new_u[i] += R[i, k] @ cur_i[k]
    x_i = ci_ref[pl.ds(off, tk), :]                       # (tk, D) bf16, VMEM resident
    nu_ref[...] += jnp.dot(a, x_i, preferred_element_type=jnp.float32)

    # item half: new_i[k] += R[i, k]^T @ cur_u[i]   (contract over the row dim)
    contrib = lax.dot_general(a, u_ref[...],
                              dimension_numbers=(((0,), (0,)), ((), ())),
                              preferred_element_type=jnp.float32)      # (tk, D)
    ni_ref[pl.ds(off, tk), :] += contrib

    # user-row epilogue: relu + running-sum update (+ folded mean scale)
    @pl.when(gk == pl.num_programs(1) - 1)
    def _():
        yu = jnp.maximum(nu_ref[...], 0.0)
        nu_ref[...] = yu
        sou_ref[...] = (su_ref[...] + yu) * scale

    # item epilogue, once at the very last grid step
    @pl.when((gi == pl.num_programs(0) - 1) & (gk == pl.num_programs(1) - 1))
    def _():
        yi = jnp.maximum(ni_ref[...], 0.0)
        ni_ref[...] = yi
        soi_ref[...] = (si_ref[...] + yi) * scale


def gccf_fused_layer(r_bf16, cur_u, cur_i, sum_u, sum_i, scale, *, tm, tk, vmem_limit):
    """Returns (new_u, sum_u', new_i, sum_i') for one layer, streaming R once."""
    M, K = r_bf16.shape
    D = cur_u.shape[1]
    tm = min(tm, _round_up(M, 16))        # 16: bf16 packs two rows per sublane
    tk = min(tk, _round_up(K, 128))
    Mp, Kp = _round_up(M, tm), _round_up(K, tk)

    cu = cur_u.astype(jnp.bfloat16)
    ci = cur_i.astype(jnp.bfloat16)
    su, si = sum_u, sum_i
    if (Mp, Kp) != (M, K):
        r_bf16 = jnp.pad(r_bf16, ((0, Mp - M), (0, Kp - K)))
    if Mp != M:
        cu = jnp.pad(cu, ((0, Mp - M), (0, 0)))
        su = jnp.pad(su, ((0, Mp - M), (0, 0)))
    if Kp != K:
        ci = jnp.pad(ci, ((0, Kp - K), (0, 0)))
        si = jnp.pad(si, ((0, Kp - K), (0, 0)))

    kernel = functools.partial(_fused_layer_kernel, tk=tk, scale=float(scale))

    nu, sou, ni, soi = pl.pallas_call(
        kernel,
        out_shape=(jax.ShapeDtypeStruct((Mp, D), jnp.float32),
                   jax.ShapeDtypeStruct((Mp, D), jnp.float32),
                   jax.ShapeDtypeStruct((Kp, D), jnp.float32),
                   jax.ShapeDtypeStruct((Kp, D), jnp.float32)),
        grid=(Mp // tm, Kp // tk),
        in_specs=[
            pl.BlockSpec((tm, tk), lambda gi, gk: (gi, gk)),   # R tile (bf16)
            pl.BlockSpec((tm, D), lambda gi, gk: (gi, 0)),     # cur_u row tile (bf16)
            pl.BlockSpec((Kp, D), lambda gi, gk: (0, 0)),      # cur_i, VMEM resident
            pl.BlockSpec((tm, D), lambda gi, gk: (gi, 0)),     # sum_u row tile
            pl.BlockSpec((Kp, D), lambda gi, gk: (0, 0)),      # sum_i, VMEM resident
        ],
        out_specs=[
            pl.BlockSpec((tm, D), lambda gi, gk: (gi, 0)),     # new_u
            pl.BlockSpec((tm, D), lambda gi, gk: (gi, 0)),     # updated user sum
            pl.BlockSpec((Kp, D), lambda gi, gk: (0, 0)),      # new_i (resident acc)
            pl.BlockSpec((Kp, D), lambda gi, gk: (0, 0)),      # updated item sum
        ],
        input_output_aliases={3: 1, 4: 3},                     # donate running sums
        compiler_params=pltpu.CompilerParams(
            # new_i accumulates across the row axis -> both axes must be sequential.
            dimension_semantics=("arbitrary", "arbitrary"),
            vmem_limit_bytes=vmem_limit),
    )(r_bf16, cu, ci, su, si)

    return nu[:M], sou[:M], ni[:K], soi[:K]


# ------------------------------------------------- unfused fallback (huge item side)

def _spmm_relu_sum_kernel(a_ref, x_ref, s_ref, y_ref, so_ref, *, scale):
    k = pl.program_id(1)

    @pl.when(k == 0)
    def _():
        y_ref[...] = jnp.zeros_like(y_ref)

    y_ref[...] += jnp.dot(a_ref[...], x_ref[...], preferred_element_type=jnp.float32)

    @pl.when(k == pl.num_programs(1) - 1)
    def _():
        y = jnp.maximum(y_ref[...], 0.0)
        y_ref[...] = y
        so_ref[...] = (s_ref[...] + y) * scale


def spmm_relu_sum(a_bf16, x_bf16, s, scale, *, tm, tk, vmem_limit):
    """(relu(a @ x), (s + relu(a @ x)) * scale); x streamed by k-tiles (no residency)."""
    M, K = a_bf16.shape
    D = x_bf16.shape[1]
    tm = min(tm, _round_up(M, 16))
    tk = min(tk, _round_up(K, 128))
    Mp, Kp = _round_up(M, tm), _round_up(K, tk)
    if (Mp, Kp) != (M, K):
        a_bf16 = jnp.pad(a_bf16, ((0, Mp - M), (0, Kp - K)))
    if Kp != K:
        x_bf16 = jnp.pad(x_bf16, ((0, Kp - K), (0, 0)))
    if Mp != M:
        s = jnp.pad(s, ((0, Mp - M), (0, 0)))

    kernel = functools.partial(_spmm_relu_sum_kernel, scale=float(scale))
    y, so = pl.pallas_call(
        kernel,
        out_shape=(jax.ShapeDtypeStruct((Mp, D), jnp.float32),
                   jax.ShapeDtypeStruct((Mp, D), jnp.float32)),
        grid=(Mp // tm, Kp // tk),
        in_specs=[
            pl.BlockSpec((tm, tk), lambda i, k: (i, k)),
            pl.BlockSpec((tk, D), lambda i, k: (k, 0)),
            pl.BlockSpec((tm, D), lambda i, k: (i, 0)),
        ],
        out_specs=[
            pl.BlockSpec((tm, D), lambda i, k: (i, 0)),
            pl.BlockSpec((tm, D), lambda i, k: (i, 0)),
        ],
        input_output_aliases={2: 1},
        compiler_params=pltpu.CompilerParams(
            dimension_semantics=("parallel", "arbitrary"),
            vmem_limit_bytes=vmem_limit),
    )(a_bf16, x_bf16, s)
    if Mp != M:
        y, so = y[:M], so[:M]
    return y, so


# ----------------------------------------------------------------- trace-time planning

def _plan(M, K, D):
    """Pick tiles / path from static shapes and the device's real VMEM capacity."""
    cap = _vmem_capacity_bytes()
    budget = cap * 3 // 4                         # headroom for compiler scratch

    tm = min(512, _round_up(M, 16))
    tk = min(2048, _round_up(K, 128))             # multiple of 256 for full-size K

    def fused_need(tm_, tk_):
        kp = _round_up(K, tk_)
        resident = kp * D * (2 * 2 + 3 * 2 * 4)               # cur_i(bf16) + si/ni/soi
        rows = tm_ * (2 * tk_ * 2 + 2 * D * 2 + 3 * 2 * D * 4)  # A + cur_u + su/nu/sou
        return resident + rows

    while fused_need(tm, tk) > budget and tk > 256:
        tk = max(256, tk // 2)
    while fused_need(tm, tk) > budget and tm > 64:
        tm = max(64, tm // 2)

    if fused_need(tm, tk) <= budget:
        need = fused_need(tm, tk)
        limit = int(min(cap - 4 * 2**20, max(2 * need, 32 * 2**20)))
        return dict(fused=True, tm=tm, tk=tk, vmem_limit=limit)

    # item side too large to keep resident -> unfused path, x streamed by k-tiles
    tm = min(512, _round_up(max(M, K), 16))
    tk = min(2048, _round_up(max(M, K), 128))
    need = tm * (2 * tk * 2 + 3 * 2 * D * 4) + 2 * tk * D * 2
    limit = int(min(cap - 4 * 2**20, max(2 * need, 32 * 2**20)))
    return dict(fused=False, tm=tm, tk=tk, vmem_limit=limit)


# ------------------------------------------------------------------------ model glue

def xavier_uniform(key, shape, dtype=jnp.float32):
    fan_in, fan_out = shape
    bound = jnp.sqrt(6.0 / (fan_in + fan_out)).astype(dtype)
    return jax.random.uniform(key, shape, dtype, minval=-bound, maxval=bound)


def build_norm_bipartite(key, n_users, n_items, density=0.05):
    """Normalized user-item block R_hat = D_u^-1/2 R D_i^-1/2 of the bipartite graph."""
    r = (jax.random.uniform(key, (n_users, n_items)) < density).astype(jnp.float32)
    deg_u = jnp.sum(r, axis=1)
    deg_i = jnp.sum(r, axis=0)
    du = jnp.where(deg_u > 0, 1.0 / jnp.sqrt(jnp.maximum(deg_u, 1e-12)), 0.0)
    di = jnp.where(deg_i > 0, 1.0 / jnp.sqrt(jnp.maximum(deg_i, 1e-12)), 0.0)
    return r * du[:, None] * di[None, :]


@functools.partial(jax.jit, static_argnames=("n_layers",))
def gccf_forward(r_hat, user_emb, item_emb, *, n_layers):
    """Exact semantics of GCCF_Encoder.forward; the sparse mm is realized as fused
    bipartite-block bf16 matmuls on the MXU (one R stream per layer)."""
    cur_u = user_emb.astype(jnp.float32)
    cur_i = item_emb.astype(jnp.float32)
    sum_u, sum_i = cur_u, cur_i                 # layer-0 (ego) term of the mean
    if n_layers == 0:
        return sum_u, sum_i

    M, K = r_hat.shape
    D = user_emb.shape[1]
    plan = _plan(M, K, D)
    r_bf16 = r_hat.astype(jnp.bfloat16)         # adjacency cast once, streamed bf16

    if plan["fused"]:
        for layer in range(n_layers):
            scale = 1.0 / (n_layers + 1) if layer == n_layers - 1 else 1.0
            cur_u, sum_u, cur_i, sum_i = gccf_fused_layer(
                r_bf16, cur_u, cur_i, sum_u, sum_i, scale,
                tm=plan["tm"], tk=plan["tk"], vmem_limit=plan["vmem_limit"])
    else:
        rt_bf16 = r_hat.T.astype(jnp.bfloat16)  # only materialized on the fallback path
        for layer in range(n_layers):
            scale = 1.0 / (n_layers + 1) if layer == n_layers - 1 else 1.0
            new_u, sum_u = spmm_relu_sum(r_bf16, cur_i.astype(jnp.bfloat16), sum_u,
                                         scale, tm=plan["tm"], tk=plan["tk"],
                                         vmem_limit=plan["vmem_limit"])
            new_i, sum_i = spmm_relu_sum(rt_bf16, cur_u.astype(jnp.bfloat16), sum_i,
                                         scale, tm=plan["tm"], tk=plan["tk"],
                                         vmem_limit=plan["vmem_limit"])
            cur_u, cur_i = new_u, new_i

    return sum_u, sum_i


# --------------------------------------------------------------------------- reference

def reference_same_precision(r_hat, user_emb, item_emb, n_layers):
    """Plain-JAX reference using the same bf16 operand / f32 accumulate precision."""
    r16 = r_hat.astype(jnp.bfloat16).astype(jnp.float32)
    rt16 = r_hat.T.astype(jnp.bfloat16).astype(jnp.float32)
    cur_u, cur_i = user_emb, item_emb
    sum_u, sum_i = user_emb, item_emb
    for _ in range(n_layers):
        xi = cur_i.astype(jnp.bfloat16).astype(jnp.float32)
        xu = cur_u.astype(jnp.bfloat16).astype(jnp.float32)
        nu = jnp.maximum(r16 @ xi, 0.0)
        ni = jnp.maximum(rt16 @ xu, 0.0)
        sum_u = sum_u + nu
        sum_i = sum_i + ni
        cur_u, cur_i = nu, ni
    denom = jnp.float32(n_layers + 1)
    return sum_u / denom, sum_i / denom


# ------------------------------------------------------------------------------ main

if __name__ == "__main__":
    n_users, n_items, emb_size, n_layers = 128, 128, 32, 2

    key = jax.random.PRNGKey(0)
    k_u, k_i, k_a = jax.random.split(key, 3)

    user_emb = xavier_uniform(k_u, (n_users, emb_size))
    item_emb = xavier_uniform(k_i, (n_items, emb_size))
    r_hat = build_norm_bipartite(k_a, n_users, n_items)

    user_all, item_all = gccf_forward(r_hat, user_emb, item_emb, n_layers=n_layers)
    jax.block_until_ready((user_all, item_all))

    # Tight check against a same-precision (bf16 operands, f32 accumulate) reference.
    ref_u, ref_i = reference_same_precision(r_hat, user_emb, item_emb, n_layers)
    assert jnp.allclose(user_all, ref_u, atol=1e-4), "user mismatch vs bf16 reference"
    assert jnp.allclose(item_all, ref_i, atol=1e-4), "item mismatch vs bf16 reference"

    # Loose check against the original full-precision dense N x N formulation.
    N = n_users + n_items
    A = jnp.zeros((N, N), jnp.float32)
    A = A.at[:n_users, n_users:].set(r_hat)
    A = A.at[n_users:, :n_users].set(r_hat.T)
    ego = jnp.concatenate([user_emb, item_emb], 0)
    terms = [ego]
    cur = ego
    for _ in range(n_layers):
        cur = jnp.maximum(A @ cur, 0.0)
        terms.append(cur)
    ref_f32 = jnp.mean(jnp.stack(terms, 1), 1)
    out_full = jnp.concatenate([user_all, item_all], 0)
    assert jnp.allclose(out_full, ref_f32, atol=1e-2), "mismatch vs f32 reference"

    assert user_all.shape == (n_users, emb_size)
    assert item_all.shape == (n_items, emb_size)
    print("KERNEL_OK")
</pallas_src>

<mosaic_0001>
module attributes {stable_mosaic.version = 11 : i64} {
  func.func @_fused_layer_kernel(%arg0: i32, %arg1: i32, %arg2: memref<128x128xbf16, #tpu.memory_space<vmem>>, %arg3: memref<128x32xbf16, #tpu.memory_space<vmem>>, %arg4: memref<128x32xbf16, #tpu.memory_space<vmem>>, %arg5: memref<128x32xf32, #tpu.memory_space<vmem>>, %arg6: memref<128x32xf32, #tpu.memory_space<vmem>>, %arg7: memref<128x32xf32, #tpu.memory_space<vmem>>, %arg8: memref<128x32xf32, #tpu.memory_space<vmem>>, %arg9: memref<128x32xf32, #tpu.memory_space<vmem>>, %arg10: memref<128x32xf32, #tpu.memory_space<vmem>>) attributes {dimension_semantics = [#tpu.dimension_semantics<arbitrary>, #tpu.dimension_semantics<arbitrary>], iteration_bounds = array<i64: 1, 1>, scalar_prefetch = 0 : i64, scratch_operands = 0 : i64, tpu.core_type = #tpu.core_type<tc>, window_params = [{transform_indices = @transform_0, window_bounds = array<i64: 128, 128>}, {transform_indices = @transform_1, window_bounds = array<i64: 128, 32>}, {pipeline_mode = #tpu.pipeline_mode<synchronous>, transform_indices = @transform_2, window_bounds = array<i64: 128, 32>}, {transform_indices = @transform_3, window_bounds = array<i64: 128, 32>}, {pipeline_mode = #tpu.pipeline_mode<synchronous>, transform_indices = @transform_4, window_bounds = array<i64: 128, 32>}, {transform_indices = @transform_5, window_bounds = array<i64: 128, 32>}, {transform_indices = @transform_6, window_bounds = array<i64: 128, 32>}, {pipeline_mode = #tpu.pipeline_mode<synchronous>, transform_indices = @transform_7, window_bounds = array<i64: 128, 32>}, {pipeline_mode = #tpu.pipeline_mode<synchronous>, transform_indices = @transform_8, window_bounds = array<i64: 128, 32>}]} {
    %c0_i32 = arith.constant 0 : i32
    %0 = arith.cmpi eq, %arg0, %c0_i32 : i32
    %c0_i32_0 = arith.constant 0 : i32
    %1 = arith.cmpi eq, %arg1, %c0_i32_0 : i32
    %2 = arith.andi %0, %1 : i1
    %3 = arith.extui %2 : i1 to i32
    %c0_i32_1 = arith.constant 0 : i32
    %4 = arith.cmpi ne, %3, %c0_i32_1 : i32
    scf.if %4 {
      %cst_20 = arith.constant 0.000000e+00 : f32
      %32 = vector.broadcast %cst_20 : f32 to vector<128x32xf32>
      %c0_21 = arith.constant 0 : index
      %c0_22 = arith.constant 0 : index
      %33 = vector.load %arg9[%c0_21, %c0_22] : memref<128x32xf32, #tpu.memory_space<vmem>>, vector<128x32xf32>
      tpu.vector_store %arg9[%c0_21, %c0_22], %32 {strides = array<i32>} : memref<128x32xf32, #tpu.memory_space<vmem>>, vector<128x32xf32>,
    } else {
    }
    %c0_i32_2 = arith.constant 0 : i32
    %5 = arith.cmpi eq, %arg1, %c0_i32_2 : i32
    %6 = arith.extui %5 : i1 to i32
    %c0_i32_3 = arith.constant 0 : i32
    %7 = arith.cmpi ne, %6, %c0_i32_3 : i32
    scf.if %7 {
      %cst_20 = arith.constant 0.000000e+00 : f32
      %32 = vector.broadcast %cst_20 : f32 to vector<128x32xf32>
      %c0_21 = arith.constant 0 : index
      %c0_22 = arith.constant 0 : index
      %33 = vector.load %arg7[%c0_21, %c0_22] : memref<128x32xf32, #tpu.memory_space<vmem>>, vector<128x32xf32>
      tpu.vector_store %arg7[%c0_21, %c0_22], %32 {strides = array<i32>} : memref<128x32xf32, #tpu.memory_space<vmem>>, vector<128x32xf32>,
    } else {
    }
    %c0 = arith.constant 0 : index
    %c0_4 = arith.constant 0 : index
    %8 = vector.load %arg2[%c0, %c0_4] : memref<128x128xbf16, #tpu.memory_space<vmem>>, vector<128x128xbf16>
    %c128_i32 = arith.constant 128 : i32
    %9 = arith.muli %arg1, %c128_i32 : i32
    %10 = tpu.assume_multiple %9, 128 : i32
    %11 = arith.index_cast %10 : i32 to index
    %c0_5 = arith.constant 0 : index
    %12 = vector.load %arg4[%11, %c0_5] : memref<128x32xbf16, #tpu.memory_space<vmem>>, vector<128x32xbf16>
    %c0_6 = arith.constant 0 : index
    %c0_7 = arith.constant 0 : index
    %13 = vector.load %arg7[%c0_6, %c0_7] : memref<128x32xf32, #tpu.memory_space<vmem>>, vector<128x32xf32>
    %cst = arith.constant dense<0.000000e+00> : vector<128x32xf32>
    %14 = tpu.matmul %8, %12, %cst {dimension_numbers = #tpu.dot_dimension_numbers<[1], [0], [0], [1], [0, 0, 1, 1], [], []>} : vector<128x128xbf16>, vector<128x32xbf16>, vector<128x32xf32> -> vector<128x32xf32>
    %15 = arith.addf %13, %14 : vector<128x32xf32>
    %c0_8 = arith.constant 0 : index
    %c0_9 = arith.constant 0 : index
    %16 = vector.load %arg7[%c0_8, %c0_9] : memref<128x32xf32, #tpu.memory_space<vmem>>, vector<128x32xf32>
    tpu.vector_store %arg7[%c0_8, %c0_9], %15 {strides = array<i32>} : memref<128x32xf32, #tpu.memory_space<vmem>>, vector<128x32xf32>,
    %c0_10 = arith.constant 0 : index
    %c0_11 = arith.constant 0 : index
    %17 = vector.load %arg3[%c0_10, %c0_11] : memref<128x32xbf16, #tpu.memory_space<vmem>>, vector<128x32xbf16>
    %cst_12 = arith.constant dense<0.000000e+00> : vector<128x32xf32>
    %18 = tpu.matmul %8, %17, %cst_12 {dimension_numbers = #tpu.dot_dimension_numbers<[0], [0], [1], [1], [0, 1, 1, 1], [], []>} : vector<128x128xbf16>, vector<128x32xbf16>, vector<128x32xf32> -> vector<128x32xf32>
    %19 = arith.index_cast %10 : i32 to index
    %c0_13 = arith.constant 0 : index
    %20 = vector.load %arg9[%19, %c0_13] : memref<128x32xf32, #tpu.memory_space<vmem>>, vector<128x32xf32>
    %21 = arith.addf %20, %18 : vector<128x32xf32>
    %22 = arith.index_cast %10 : i32 to index
    %c0_14 = arith.constant 0 : index
    %23 = vector.load %arg9[%22, %c0_14] : memref<128x32xf32, #tpu.memory_space<vmem>>, vector<128x32xf32>
    tpu.vector_store %arg9[%22, %c0_14], %21 {strides = array<i32>} : memref<128x32xf32, #tpu.memory_space<vmem>>, vector<128x32xf32>,
    %c0_i32_15 = arith.constant 0 : i32
    %24 = arith.cmpi eq, %arg1, %c0_i32_15 : i32
    %25 = arith.extui %24 : i1 to i32
    %c0_i32_16 = arith.constant 0 : i32
    %26 = arith.cmpi ne, %25, %c0_i32_16 : i32
    scf.if %26 {
      %c0_20 = arith.constant 0 : index
      %c0_21 = arith.constant 0 : index
      %32 = vector.load %arg7[%c0_20, %c0_21] : memref<128x32xf32, #tpu.memory_space<vmem>>, vector<128x32xf32>
      %cst_22 = arith.constant 0.000000e+00 : f32
      %33 = vector.broadcast %cst_22 : f32 to vector<128x32xf32>
      %34 = arith.maximumf %32, %33 : vector<128x32xf32>
      %c0_23 = arith.constant 0 : index
      %c0_24 = arith.constant 0 : index
      %35 = vector.load %arg7[%c0_23, %c0_24] : memref<128x32xf32, #tpu.memory_space<vmem>>, vector<128x32xf32>
      tpu.vector_store %arg7[%c0_23, %c0_24], %34 {strides = array<i32>} : memref<128x32xf32, #tpu.memory_space<vmem>>, vector<128x32xf32>,
      %c0_25 = arith.constant 0 : index
      %c0_26 = arith.constant 0 : index
      %36 = vector.load %arg5[%c0_25, %c0_26] : memref<128x32xf32, #tpu.memory_space<vmem>>, vector<128x32xf32>
      %37 = arith.addf %36, %34 : vector<128x32xf32>
      %cst_27 = arith.constant 1.000000e+00 : f32
      %38 = vector.broadcast %cst_27 : f32 to vector<128x32xf32>
      %39 = arith.mulf %37, %38 : vector<128x32xf32>
      %c0_28 = arith.constant 0 : index
      %c0_29 = arith.constant 0 : index
      %40 = vector.load %arg8[%c0_28, %c0_29] : memref<128x32xf32, #tpu.memory_space<vmem>>, vector<128x32xf32>
      tpu.vector_store %arg8[%c0_28, %c0_29], %39 {strides = array<i32>} : memref<128x32xf32, #tpu.memory_space<vmem>>, vector<128x32xf32>,
    } else {
    }
    %c0_i32_17 = arith.constant 0 : i32
    %27 = arith.cmpi eq, %arg0, %c0_i32_17 : i32
    %c0_i32_18 = arith.constant 0 : i32
    %28 = arith.cmpi eq, %arg1, %c0_i32_18 : i32
    %29 = arith.andi %27, %28 : i1
    %30 = arith.extui %29 : i1 to i32
    %c0_i32_19 = arith.constant 0 : i32
    %31 = arith.cmpi ne, %30, %c0_i32_19 : i32
    scf.if %31 {
      %c0_20 = arith.constant 0 : index
      %c0_21 = arith.constant 0 : index
      %32 = vector.load %arg9[%c0_20, %c0_21] : memref<128x32xf32, #tpu.memory_space<vmem>>, vector<128x32xf32>
      %cst_22 = arith.constant 0.000000e+00 : f32
      %33 = vector.broadcast %cst_22 : f32 to vector<128x32xf32>
      %34 = arith.maximumf %32, %33 : vector<128x32xf32>
      %c0_23 = arith.constant 0 : index
      %c0_24 = arith.constant 0 : index
      %35 = vector.load %arg9[%c0_23, %c0_24] : memref<128x32xf32, #tpu.memory_space<vmem>>, vector<128x32xf32>
      tpu.vector_store %arg9[%c0_23, %c0_24], %34 {strides = array<i32>} : memref<128x32xf32, #tpu.memory_space<vmem>>, vector<128x32xf32>,
      %c0_25 = arith.constant 0 : index
      %c0_26 = arith.constant 0 : index
      %36 = vector.load %arg6[%c0_25, %c0_26] : memref<128x32xf32, #tpu.memory_space<vmem>>, vector<128x32xf32>
      %37 = arith.addf %36, %34 : vector<128x32xf32>
      %cst_27 = arith.constant 1.000000e+00 : f32
      %38 = vector.broadcast %cst_27 : f32 to vector<128x32xf32>
      %39 = arith.mulf %37, %38 : vector<128x32xf32>
      %c0_28 = arith.constant 0 : index
      %c0_29 = arith.constant 0 : index
      %40 = vector.load %arg10[%c0_28, %c0_29] : memref<128x32xf32, #tpu.memory_space<vmem>>, vector<128x32xf32>
      tpu.vector_store %arg10[%c0_28, %c0_29], %39 {strides = array<i32>} : memref<128x32xf32, #tpu.memory_space<vmem>>, vector<128x32xf32>,
    } else {
    }
    return
  }
  func.func @transform_0(%arg0: i32, %arg1: i32) -> (i32, i32) {
    %c0_i32 = arith.constant 0 : i32
    return %arg0, %arg1 : i32, i32
  }
  func.func @transform_1(%arg0: i32, %arg1: i32) -> (i32, i32) {
    %c0_i32 = arith.constant 0 : i32
    %c0_i32_0 = arith.constant 0 : i32
    return %arg0, %c0_i32 : i32, i32
  }
  func.func @transform_2(%arg0: i32, %arg1: i32) -> (i32, i32) {
    %c0_i32 = arith.constant 0 : i32
    %c0_i32_0 = arith.constant 0 : i32
    %c0_i32_1 = arith.constant 0 : i32
    return %c0_i32, %c0_i32_0 : i32, i32
  }
  func.func @transform_3(%arg0: i32, %arg1: i32) -> (i32, i32) {
    %c0_i32 = arith.constant 0 : i32
    %c0_i32_0 = arith.constant 0 : i32
    return %arg0, %c0_i32 : i32, i32
  }
  func.func @transform_4(%arg0: i32, %arg1: i32) -> (i32, i32) {
    %c0_i32 = arith.constant 0 : i32
    %c0_i32_0 = arith.constant 0 : i32
    %c0_i32_1 = arith.constant 0 : i32
    return %c0_i32, %c0_i32_0 : i32, i32
  }
  func.func @transform_5(%arg0: i32, %arg1: i32) -> (i32, i32) {
    %c0_i32 = arith.constant 0 : i32
    %c0_i32_0 = arith.constant 0 : i32
    return %arg0, %c0_i32 : i32, i32
  }
  func.func @transform_6(%arg0: i32, %arg1: i32) -> (i32, i32) {
    %c0_i32 = arith.constant 0 : i32
    %c0_i32_0 = arith.constant 0 : i32
    return %arg0, %c0_i32 : i32, i32
  }
  func.func @transform_7(%arg0: i32, %arg1: i32) -> (i32, i32) {
    %c0_i32 = arith.constant 0 : i32
    %c0_i32_0 = arith.constant 0 : i32
    %c0_i32_1 = arith.constant 0 : i32
    return %c0_i32, %c0_i32_0 : i32, i32
  }
  func.func @transform_8(%arg0: i32, %arg1: i32) -> (i32, i32) {
    %c0_i32 = arith.constant 0 : i32
    %c0_i32_0 = arith.constant 0 : i32
    %c0_i32_1 = arith.constant 0 : i32
    return %c0_i32, %c0_i32_0 : i32, i32
  }
}

module attributes {stable_mosaic.version = 11 : i64} {
  func.func @_fused_layer_kernel(%arg0: i32, %arg1: i32, %arg2: memref<128x128xbf16, #tpu.memory_space<vmem>>, %arg3: memref<128x32xbf16, #tpu.memory_space<vmem>>, %arg4: memref<128x32xbf16, #tpu.memory_space<vmem>>, %arg5: memref<128x32xf32, #tpu.memory_space<vmem>>, %arg6: memref<128x32xf32, #tpu.memory_space<vmem>>, %arg7: memref<128x32xf32, #tpu.memory_space<vmem>>, %arg8: memref<128x32xf32, #tpu.memory_space<vmem>>, %arg9: memref<128x32xf32, #tpu.memory_space<vmem>>, %arg10: memref<128x32xf32, #tpu.memory_space<vmem>>) attributes {dimension_semantics = [#tpu.dimension_semantics<arbitrary>, #tpu.dimension_semantics<arbitrary>], iteration_bounds = array<i64: 1, 1>, scalar_prefetch = 0 : i64, scratch_operands = 0 : i64, tpu.core_type = #tpu.core_type<tc>, window_params = [{transform_indices = @transform_0, window_bounds = array<i64: 128, 128>}, {transform_indices = @transform_1, window_bounds = array<i64: 128, 32>}, {pipeline_mode = #tpu.pipeline_mode<synchronous>, transform_indices = @transform_2, window_bounds = array<i64: 128, 32>}, {transform_indices = @transform_3, window_bounds = array<i64: 128, 32>}, {pipeline_mode = #tpu.pipeline_mode<synchronous>, transform_indices = @transform_4, window_bounds = array<i64: 128, 32>}, {transform_indices = @transform_5, window_bounds = array<i64: 128, 32>}, {transform_indices = @transform_6, window_bounds = array<i64: 128, 32>}, {pipeline_mode = #tpu.pipeline_mode<synchronous>, transform_indices = @transform_7, window_bounds = array<i64: 128, 32>}, {pipeline_mode = #tpu.pipeline_mode<synchronous>, transform_indices = @transform_8, window_bounds = array<i64: 128, 32>}]} {
    %c0_i32 = arith.constant 0 : i32
    %0 = arith.cmpi eq, %arg0, %c0_i32 : i32
    %c0_i32_0 = arith.constant 0 : i32
    %1 = arith.cmpi eq, %arg1, %c0_i32_0 : i32
    %2 = arith.andi %0, %1 : i1
    %3 = arith.extui %2 : i1 to i32
    %c0_i32_1 = arith.constant 0 : i32
    %4 = arith.cmpi ne, %3, %c0_i32_1 : i32
    scf.if %4 {
      %cst_20 = arith.constant 0.000000e+00 : f32
      %32 = vector.broadcast %cst_20 : f32 to vector<128x32xf32>
      %c0_21 = arith.constant 0 : index
      %c0_22 = arith.constant 0 : index
      %33 = vector.load %arg9[%c0_21, %c0_22] : memref<128x32xf32, #tpu.memory_space<vmem>>, vector<128x32xf32>
      tpu.vector_store %arg9[%c0_21, %c0_22], %32 {strides = array<i32>} : memref<128x32xf32, #tpu.memory_space<vmem>>, vector<128x32xf32>,
    } else {
    }
    %c0_i32_2 = arith.constant 0 : i32
    %5 = arith.cmpi eq, %arg1, %c0_i32_2 : i32
    %6 = arith.extui %5 : i1 to i32
    %c0_i32_3 = arith.constant 0 : i32
    %7 = arith.cmpi ne, %6, %c0_i32_3 : i32
    scf.if %7 {
      %cst_20 = arith.constant 0.000000e+00 : f32
      %32 = vector.broadcast %cst_20 : f32 to vector<128x32xf32>
      %c0_21 = arith.constant 0 : index
      %c0_22 = arith.constant 0 : index
      %33 = vector.load %arg7[%c0_21, %c0_22] : memref<128x32xf32, #tpu.memory_space<vmem>>, vector<128x32xf32>
      tpu.vector_store %arg7[%c0_21, %c0_22], %32 {strides = array<i32>} : memref<128x32xf32, #tpu.memory_space<vmem>>, vector<128x32xf32>,
    } else {
    }
    %c0 = arith.constant 0 : index
    %c0_4 = arith.constant 0 : index
    %8 = vector.load %arg2[%c0, %c0_4] : memref<128x128xbf16, #tpu.memory_space<vmem>>, vector<128x128xbf16>
    %c128_i32 = arith.constant 128 : i32
    %9 = arith.muli %arg1, %c128_i32 : i32
    %10 = tpu.assume_multiple %9, 128 : i32
    %11 = arith.index_cast %10 : i32 to index
    %c0_5 = arith.constant 0 : index
    %12 = vector.load %arg4[%11, %c0_5] : memref<128x32xbf16, #tpu.memory_space<vmem>>, vector<128x32xbf16>
    %c0_6 = arith.constant 0 : index
    %c0_7 = arith.constant 0 : index
    %13 = vector.load %arg7[%c0_6, %c0_7] : memref<128x32xf32, #tpu.memory_space<vmem>>, vector<128x32xf32>
    %cst = arith.constant dense<0.000000e+00> : vector<128x32xf32>
    %14 = tpu.matmul %8, %12, %cst {dimension_numbers = #tpu.dot_dimension_numbers<[1], [0], [0], [1], [0, 0, 1, 1], [], []>} : vector<128x128xbf16>, vector<128x32xbf16>, vector<128x32xf32> -> vector<128x32xf32>
    %15 = arith.addf %13, %14 : vector<128x32xf32>
    %c0_8 = arith.constant 0 : index
    %c0_9 = arith.constant 0 : index
    %16 = vector.load %arg7[%c0_8, %c0_9] : memref<128x32xf32, #tpu.memory_space<vmem>>, vector<128x32xf32>
    tpu.vector_store %arg7[%c0_8, %c0_9], %15 {strides = array<i32>} : memref<128x32xf32, #tpu.memory_space<vmem>>, vector<128x32xf32>,
    %c0_10 = arith.constant 0 : index
    %c0_11 = arith.constant 0 : index
    %17 = vector.load %arg3[%c0_10, %c0_11] : memref<128x32xbf16, #tpu.memory_space<vmem>>, vector<128x32xbf16>
    %cst_12 = arith.constant dense<0.000000e+00> : vector<128x32xf32>
    %18 = tpu.matmul %8, %17, %cst_12 {dimension_numbers = #tpu.dot_dimension_numbers<[0], [0], [1], [1], [0, 1, 1, 1], [], []>} : vector<128x128xbf16>, vector<128x32xbf16>, vector<128x32xf32> -> vector<128x32xf32>
    %19 = arith.index_cast %10 : i32 to index
    %c0_13 = arith.constant 0 : index
    %20 = vector.load %arg9[%19, %c0_13] : memref<128x32xf32, #tpu.memory_space<vmem>>, vector<128x32xf32>
    %21 = arith.addf %20, %18 : vector<128x32xf32>
    %22 = arith.index_cast %10 : i32 to index
    %c0_14 = arith.constant 0 : index
    %23 = vector.load %arg9[%22, %c0_14] : memref<128x32xf32, #tpu.memory_space<vmem>>, vector<128x32xf32>
    tpu.vector_store %arg9[%22, %c0_14], %21 {strides = array<i32>} : memref<128x32xf32, #tpu.memory_space<vmem>>, vector<128x32xf32>,
    %c0_i32_15 = arith.constant 0 : i32
    %24 = arith.cmpi eq, %arg1, %c0_i32_15 : i32
    %25 = arith.extui %24 : i1 to i32
    %c0_i32_16 = arith.constant 0 : i32
    %26 = arith.cmpi ne, %25, %c0_i32_16 : i32
    scf.if %26 {
      %c0_20 = arith.constant 0 : index
      %c0_21 = arith.constant 0 : index
      %32 = vector.load %arg7[%c0_20, %c0_21] : memref<128x32xf32, #tpu.memory_space<vmem>>, vector<128x32xf32>
      %cst_22 = arith.constant 0.000000e+00 : f32
      %33 = vector.broadcast %cst_22 : f32 to vector<128x32xf32>
      %34 = arith.maximumf %32, %33 : vector<128x32xf32>
      %c0_23 = arith.constant 0 : index
      %c0_24 = arith.constant 0 : index
      %35 = vector.load %arg7[%c0_23, %c0_24] : memref<128x32xf32, #tpu.memory_space<vmem>>, vector<128x32xf32>
      tpu.vector_store %arg7[%c0_23, %c0_24], %34 {strides = array<i32>} : memref<128x32xf32, #tpu.memory_space<vmem>>, vector<128x32xf32>,
      %c0_25 = arith.constant 0 : index
      %c0_26 = arith.constant 0 : index
      %36 = vector.load %arg5[%c0_25, %c0_26] : memref<128x32xf32, #tpu.memory_space<vmem>>, vector<128x32xf32>
      %37 = arith.addf %36, %34 : vector<128x32xf32>
      %cst_27 = arith.constant 0.333333343 : f32
      %38 = vector.broadcast %cst_27 : f32 to vector<128x32xf32>
      %39 = arith.mulf %37, %38 : vector<128x32xf32>
      %c0_28 = arith.constant 0 : index
      %c0_29 = arith.constant 0 : index
      %40 = vector.load %arg8[%c0_28, %c0_29] : memref<128x32xf32, #tpu.memory_space<vmem>>, vector<128x32xf32>
      tpu.vector_store %arg8[%c0_28, %c0_29], %39 {strides = array<i32>} : memref<128x32xf32, #tpu.memory_space<vmem>>, vector<128x32xf32>,
    } else {
    }
    %c0_i32_17 = arith.constant 0 : i32
    %27 = arith.cmpi eq, %arg0, %c0_i32_17 : i32
    %c0_i32_18 = arith.constant 0 : i32
    %28 = arith.cmpi eq, %arg1, %c0_i32_18 : i32
    %29 = arith.andi %27, %28 : i1
    %30 = arith.extui %29 : i1 to i32
    %c0_i32_19 = arith.constant 0 : i32
    %31 = arith.cmpi ne, %30, %c0_i32_19 : i32
    scf.if %31 {
      %c0_20 = arith.constant 0 : index
      %c0_21 = arith.constant 0 : index
      %32 = vector.load %arg9[%c0_20, %c0_21] : memref<128x32xf32, #tpu.memory_space<vmem>>, vector<128x32xf32>
      %cst_22 = arith.constant 0.000000e+00 : f32
      %33 = vector.broadcast %cst_22 : f32 to vector<128x32xf32>
      %34 = arith.maximumf %32, %33 : vector<128x32xf32>
      %c0_23 = arith.constant 0 : index
      %c0_24 = arith.constant 0 : index
      %35 = vector.load %arg9[%c0_23, %c0_24] : memref<128x32xf32, #tpu.memory_space<vmem>>, vector<128x32xf32>
      tpu.vector_store %arg9[%c0_23, %c0_24], %34 {strides = array<i32>} : memref<128x32xf32, #tpu.memory_space<vmem>>, vector<128x32xf32>,
      %c0_25 = arith.constant 0 : index
      %c0_26 = arith.constant 0 : index
      %36 = vector.load %arg6[%c0_25, %c0_26] : memref<128x32xf32, #tpu.memory_space<vmem>>, vector<128x32xf32>
      %37 = arith.addf %36, %34 : vector<128x32xf32>
      %cst_27 = arith.constant 0.333333343 : f32
      %38 = vector.broadcast %cst_27 : f32 to vector<128x32xf32>
      %39 = arith.mulf %37, %38 : vector<128x32xf32>
      %c0_28 = arith.constant 0 : index
      %c0_29 = arith.constant 0 : index
      %40 = vector.load %arg10[%c0_28, %c0_29] : memref<128x32xf32, #tpu.memory_space<vmem>>, vector<128x32xf32>
      tpu.vector_store %arg10[%c0_28, %c0_29], %39 {strides = array<i32>} : memref<128x32xf32, #tpu.memory_space<vmem>>, vector<128x32xf32>,
    } else {
    }
    return
  }
  func.func @transform_0(%arg0: i32, %arg1: i32) -> (i32, i32) {
    %c0_i32 = arith.constant 0 : i32
    return %arg0, %arg1 : i32, i32
  }
  func.func @transform_1(%arg0: i32, %arg1: i32) -> (i32, i32) {
    %c0_i32 = arith.constant 0 : i32
    %c0_i32_0 = arith.constant 0 : i32
    return %arg0, %c0_i32 : i32, i32
  }
  func.func @transform_2(%arg0: i32, %arg1: i32) -> (i32, i32) {
    %c0_i32 = arith.constant 0 : i32
    %c0_i32_0 = arith.constant 0 : i32
    %c0_i32_1 = arith.constant 0 : i32
    return %c0_i32, %c0_i32_0 : i32, i32
  }
  func.func @transform_3(%arg0: i32, %arg1: i32) -> (i32, i32) {
    %c0_i32 = arith.constant 0 : i32
    %c0_i32_0 = arith.constant 0 : i32
    return %arg0, %c0_i32 : i32, i32
  }
  func.func @transform_4(%arg0: i32, %arg1: i32) -> (i32, i32) {
    %c0_i32 = arith.constant 0 : i32
    %c0_i32_0 = arith.constant 0 : i32
    %c0_i32_1 = arith.constant 0 : i32
    return %c0_i32, %c0_i32_0 : i32, i32
  }
  func.func @transform_5(%arg0: i32, %arg1: i32) -> (i32, i32) {
    %c0_i32 = arith.constant 0 : i32
    %c0_i32_0 = arith.constant 0 : i32
    return %arg0, %c0_i32 : i32, i32
  }
  func.func @transform_6(%arg0: i32, %arg1: i32) -> (i32, i32) {
    %c0_i32 = arith.constant 0 : i32
    %c0_i32_0 = arith.constant 0 : i32
    return %arg0, %c0_i32 : i32, i32
  }
  func.func @transform_7(%arg0: i32, %arg1: i32) -> (i32, i32) {
    %c0_i32 = arith.constant 0 : i32
    %c0_i32_0 = arith.constant 0 : i32
    %c0_i32_1 = arith.constant 0 : i32
    return %c0_i32, %c0_i32_0 : i32, i32
  }
  func.func @transform_8(%arg0: i32, %arg1: i32) -> (i32, i32) {
    %c0_i32 = arith.constant 0 : i32
    %c0_i32_0 = arith.constant 0 : i32
    %c0_i32_1 = arith.constant 0 : i32
    return %c0_i32, %c0_i32_0 : i32, i32
  }
}

</mosaic_0001>

<llo_original>
// kernel: gccf_forward.2
$region0: #{gccf_forward.2}
  #allocation0 [shape = 'u32[]', space=smem, size = 0x4, offset = 0x4, fixed_abs, tag = 'smem constant byte address 0x4 - core index']
  #allocation1 [shape = 'u32[72,128]{1,0:T(1,128)}', space=vmem, size = 0x9000, scoped, tag = 'internal scratch']
  %s0 = inlined_call_operand.vmem [shape: bf16[128,128], index: 0, kind: input, shape index: {}]
  %s1 = inlined_call_operand.vmem [shape: bf16[128,32], index: 1, kind: input, shape index: {}]
  %s2 = inlined_call_operand.vmem [shape: bf16[128,32], index: 2, kind: input, shape index: {}]
  %s3 = inlined_call_operand.vmem [shape: f32[128,32], index: 3, kind: input, shape index: {}, may-alias: {3,6}]
  %s4 = inlined_call_operand.vmem [shape: f32[128,32], index: 4, kind: input, shape index: {}, may-alias: {4,8}]
  %s5 = inlined_call_operand.vmem [shape: f32[128,32], index: 5, kind: output, shape index: {0}]
  %s6 = inlined_call_operand.vmem [shape: f32[128,32], index: 6, kind: output, shape index: {1}, may-alias: {3,6}]
  %s7 = inlined_call_operand.vmem [shape: f32[128,32], index: 7, kind: output, shape index: {2}]
  %s8 = inlined_call_operand.vmem [shape: f32[128,32], index: 8, kind: output, shape index: {3}, may-alias: {4,8}]
  %9 = xla_tuple %s5, %s6, %s7, %s8
  %s10 = sld [smem:[#allocation0]]
  $region70: #{gccf_forward.2} parent=0
    _
  %s12 = ssub.s32 1, %s10
  %s13 = scalar_select 0, %s12, %s10
  // Predicated region
  $region2: #{gccf_forward.2} parent=0 // pred_check
    _
  $region3: #{gccf_forward.2} parent=0 // pred_check_branch
    %15 = sbr.rel (0) target = $region5
  $region4: #{gccf_forward.2} parent=0 // pred_region
    _
  $region5: #{gccf_forward.2} parent=0 // pred_fallthru
    _
  // Predicated region
  $region6: #{gccf_forward.2} parent=0 // pred_check
    _
  $region7: #{gccf_forward.2} parent=0 // pred_check_branch
    %17 = sbr.rel (0) target = $region9
  $region8: #{gccf_forward.2} parent=0 // pred_region
    _
  $region9: #{gccf_forward.2} parent=0 // pred_fallthru
    _
  // Predicated region
  $region10: #{gccf_forward.2} parent=0 // pred_check
    _
  $region11: #{gccf_forward.2} parent=0 // pred_check_branch
    %19 = sbr.rel (0) target = $region13
  $region12: #{gccf_forward.2} parent=0 // pred_region
    _
  $region13: #{gccf_forward.2} parent=0 // pred_fallthru
    _
  // Predicated region
  $region14: #{gccf_forward.2} parent=0 // pred_check
    _
  $region15: #{gccf_forward.2} parent=0 // pred_check_branch
    %21 = sbr.rel (0) target = $region17
  $region16: #{gccf_forward.2} parent=0 // pred_region
    _
  $region17: #{gccf_forward.2} parent=0 // pred_fallthru
    _
  // Predicated region
  $region18: #{gccf_forward.2} parent=0 // pred_check
    _
  $region19: #{gccf_forward.2} parent=0 // pred_check_branch
    %23 = sbr.rel (0) target = $region21
  $region20: #{gccf_forward.2} parent=0 // pred_region
    _
  $region21: #{gccf_forward.2} parent=0 // pred_fallthru
    _
  %p24 = scmp.eq.s32.totalorder 0, 0
  %p25 = scmp.eq.s32.totalorder 0, 0
  %p26 = pnand %p24, %p25
  %p27 = pneg %p26
  // Predicated region
  $region22: #{gccf_forward.2} parent=0 // pred_check
    _
  $region23: #{gccf_forward.2} parent=0 // pred_check_branch
    %29 = sbr.rel (%p26) target = $region25
  $region24: #{gccf_forward.2} parent=0 // pred_region
    %vm30 = vcmask 261120
    %31 = vst.msk [vmem:[%s7] sm:$0xff] %vm30, 0.0
    %32 = vst.msk [vmem:[%s7 + $0x8] sm:$0xff] %vm30, 0.0
    %33 = vst.msk [vmem:[%s7 + $0x10] sm:$0xff] %vm30, 0.0
    %34 = vst.msk [vmem:[%s7 + $0x18] sm:$0xff] %vm30, 0.0
    %35 = vst.msk [vmem:[%s7 + $0x20] sm:$0xff] %vm30, 0.0
    %36 = vst.msk [vmem:[%s7 + $0x28] sm:$0xff] %vm30, 0.0
    %37 = vst.msk [vmem:[%s7 + $0x30] sm:$0xff] %vm30, 0.0
    %38 = vst.msk [vmem:[%s7 + $0x38] sm:$0xff] %vm30, 0.0
    %39 = vst.msk [vmem:[%s7 + $0x40] sm:$0xff] %vm30, 0.0
    %40 = vst.msk [vmem:[%s7 + $0x48] sm:$0xff] %vm30, 0.0
    %41 = vst.msk [vmem:[%s7 + $0x50] sm:$0xff] %vm30, 0.0
    %42 = vst.msk [vmem:[%s7 + $0x58] sm:$0xff] %vm30, 0.0
    %43 = vst.msk [vmem:[%s7 + $0x60] sm:$0xff] %vm30, 0.0
    %44 = vst.msk [vmem:[%s7 + $0x68] sm:$0xff] %vm30, 0.0
    %45 = vst.msk [vmem:[%s7 + $0x70] sm:$0xff] %vm30, 0.0
    %46 = vst.msk [vmem:[%s7 + $0x78] sm:$0xff] %vm30, 0.0
  $region25: #{gccf_forward.2} parent=0 // pred_fallthru
    _
  // Predicated region
  $region26: #{gccf_forward.2} parent=0 // pred_check
    %p47 = pneg %p25
  $region27: #{gccf_forward.2} parent=0 // pred_check_branch
    %49 = sbr.rel (%p47) target = $region29
  $region28: #{gccf_forward.2} parent=0 // pred_region
    %vm50 = vcmask 261120
    %51 = vst.msk [vmem:[%s5] sm:$0xff] %vm50, 0.0
    %52 = vst.msk [vmem:[%s5 + $0x8] sm:$0xff] %vm50, 0.0
    %53 = vst.msk [vmem:[%s5 + $0x10] sm:$0xff] %vm50, 0.0
    %54 = vst.msk [vmem:[%s5 + $0x18] sm:$0xff] %vm50, 0.0
    %55 = vst.msk [vmem:[%s5 + $0x20] sm:$0xff] %vm50, 0.0
    %56 = vst.msk [vmem:[%s5 + $0x28] sm:$0xff] %vm50, 0.0
    %57 = vst.msk [vmem:[%s5 + $0x30] sm:$0xff] %vm50, 0.0
    %58 = vst.msk [vmem:[%s5 + $0x38] sm:$0xff] %vm50, 0.0
    %59 = vst.msk [vmem:[%s5 + $0x40] sm:$0xff] %vm50, 0.0
    %60 = vst.msk [vmem:[%s5 + $0x48] sm:$0xff] %vm50, 0.0
    %61 = vst.msk [vmem:[%s5 + $0x50] sm:$0xff] %vm50, 0.0
    %62 = vst.msk [vmem:[%s5 + $0x58] sm:$0xff] %vm50, 0.0
    %63 = vst.msk [vmem:[%s5 + $0x60] sm:$0xff] %vm50, 0.0
    %64 = vst.msk [vmem:[%s5 + $0x68] sm:$0xff] %vm50, 0.0
    %65 = vst.msk [vmem:[%s5 + $0x70] sm:$0xff] %vm50, 0.0
    %66 = vst.msk [vmem:[%s5 + $0x78] sm:$0xff] %vm50, 0.0
  $region29: #{gccf_forward.2} parent=0 // pred_fallthru
    _
  %v67 = vld [vmem:[%s0] sm:$0xf]
  %v68 = vld [vmem:[%s0 + $0x4] sm:$0xf]
  %v69 = vld [vmem:[%s0 + $0x8] sm:$0xf]
  %v70 = vld [vmem:[%s0 + $0xc] sm:$0xf]
  %v71 = vld [vmem:[%s0 + $0x10] sm:$0xf]
  %v72 = vld [vmem:[%s0 + $0x14] sm:$0xf]
  %v73 = vld [vmem:[%s0 + $0x18] sm:$0xf]
  %v74 = vld [vmem:[%s0 + $0x1c] sm:$0xf]
  %v75 = vld [vmem:[%s0 + $0x20] sm:$0xf]
  %v76 = vld [vmem:[%s0 + $0x24] sm:$0xf]
  %v77 = vld [vmem:[%s0 + $0x28] sm:$0xf]
  %v78 = vld [vmem:[%s0 + $0x2c] sm:$0xf]
  %v79 = vld [vmem:[%s0 + $0x30] sm:$0xf]
  %v80 = vld [vmem:[%s0 + $0x34] sm:$0xf]
  %v81 = vld [vmem:[%s0 + $0x38] sm:$0xf]
  %v82 = vld [vmem:[%s0 + $0x3c] sm:$0xf]
  %s83 = smul.u32 0, 128
  %s84 = sshra.s32 %s83, 3
  %s85 = sand.u32 %s83, 7
  %s86 = smul.addr %s84, 4
  %s87 = scalar_lea.vmem %s2, %s86
  %v88 = vld [vmem:[%s87] sm:$0xf]
  %v89 = vld [vmem:[%s87 + $0x4] sm:$0xf]
  %v90 = vld [vmem:[%s87 + $0x8] sm:$0xf]
  %v91 = vld [vmem:[%s87 + $0xc] sm:$0xf]
  %v92 = vld [vmem:[%s87 + $0x10] sm:$0xf]
  %v93 = vld [vmem:[%s87 + $0x14] sm:$0xf]
  %v94 = vld [vmem:[%s87 + $0x18] sm:$0xf]
  %v95 = vld [vmem:[%s87 + $0x1c] sm:$0xf]
  %v96 = vld [vmem:[%s87 + $0x20] sm:$0xf]
  %v97 = vld [vmem:[%s87 + $0x24] sm:$0xf]
  %v98 = vld [vmem:[%s87 + $0x28] sm:$0xf]
  %v99 = vld [vmem:[%s87 + $0x2c] sm:$0xf]
  %v100 = vld [vmem:[%s87 + $0x30] sm:$0xf]
  %v101 = vld [vmem:[%s87 + $0x34] sm:$0xf]
  %v102 = vld [vmem:[%s87 + $0x38] sm:$0xf]
  %v103 = vld [vmem:[%s87 + $0x3c] sm:$0xf]
  %v104 = vld [vmem:[%s5] sm:$0xff]
  %v105 = vld [vmem:[%s5 + $0x8] sm:$0xff]
  %v106 = vld [vmem:[%s5 + $0x10] sm:$0xff]
  %v107 = vld [vmem:[%s5 + $0x18] sm:$0xff]
  %v108 = vld [vmem:[%s5 + $0x20] sm:$0xff]
  %v109 = vld [vmem:[%s5 + $0x28] sm:$0xff]
  %v110 = vld [vmem:[%s5 + $0x30] sm:$0xff]
  %v111 = vld [vmem:[%s5 + $0x38] sm:$0xff]
  %v112 = vld [vmem:[%s5 + $0x40] sm:$0xff]
  %v113 = vld [vmem:[%s5 + $0x48] sm:$0xff]
  %v114 = vld [vmem:[%s5 + $0x50] sm:$0xff]
  %v115 = vld [vmem:[%s5 + $0x58] sm:$0xff]
  %v116 = vld [vmem:[%s5 + $0x60] sm:$0xff]
  %v117 = vld [vmem:[%s5 + $0x68] sm:$0xff]
  %v118 = vld [vmem:[%s5 + $0x70] sm:$0xff]
  %v119 = vld [vmem:[%s5 + $0x78] sm:$0xff]
  %v136 = vunpack.c.l.b16 %v67
  %v137 = vunpack.c.l.b16 %v68
  %v138 = vunpack.c.l.b16 %v69
  %v139 = vunpack.c.l.b16 %v70
  %v140 = vunpack.c.l.b16 %v71
  %v141 = vunpack.c.l.b16 %v72
  %v142 = vunpack.c.l.b16 %v73
  %v143 = vunpack.c.l.b16 %v74
  %v144 = vunpack.c.l.b16 %v75
  %v145 = vunpack.c.l.b16 %v76
  %v146 = vunpack.c.l.b16 %v77
  %v147 = vunpack.c.l.b16 %v78
  %v148 = vunpack.c.l.b16 %v79
  %v149 = vunpack.c.l.b16 %v80
  %v150 = vunpack.c.l.b16 %v81
  %v151 = vunpack.c.l.b16 %v82
  %v152 = vpack.c.b16 %v137, %v136
  %v153 = vpack.c.b16 %v139, %v138
  %v154 = vpack.c.b16 %v141, %v140
  %v155 = vpack.c.b16 %v143, %v142
  %v156 = vpack.c.b16 %v145, %v144
  %v157 = vpack.c.b16 %v147, %v146
  %v158 = vpack.c.b16 %v149, %v148
  %v159 = vpack.c.b16 %v151, %v150
  %v184 = vunpack.c.l.b16 %v88
  %v185 = vunpack.c.l.b16 %v89
  %v186 = vunpack.c.l.b16 %v90
  %v187 = vunpack.c.l.b16 %v91
  %v188 = vunpack.c.l.b16 %v92
  %v189 = vunpack.c.l.b16 %v93
  %v190 = vunpack.c.l.b16 %v94
  %v191 = vunpack.c.l.b16 %v95
  %v192 = vunpack.c.l.b16 %v96
  %v193 = vunpack.c.l.b16 %v97
  %v194 = vunpack.c.l.b16 %v98
  %v195 = vunpack.c.l.b16 %v99
  %v196 = vunpack.c.l.b16 %v100
  %v197 = vunpack.c.l.b16 %v101
  %v198 = vunpack.c.l.b16 %v102
  %v199 = vunpack.c.l.b16 %v103
  %v200 = vpack.c.b16 %v185, %v184
  %v201 = vpack.c.b16 %v187, %v186
  %v202 = vpack.c.b16 %v189, %v188
  %v203 = vpack.c.b16 %v191, %v190
  %v204 = vpack.c.b16 %v193, %v192
  %v205 = vpack.c.b16 %v195, %v194
  %v206 = vpack.c.b16 %v197, %v196
  %v207 = vpack.c.b16 %v199, %v198
  %216 = vmatpush.bf16.msra.mxu0 %v207
  %217 = vmatpush.bf16.msra.mxu0 %v206
  %218 = vmatpush.bf16.msra.mxu0 %v205
  %219 = vmatpush.bf16.msra.mxu0 %v204
  %220 = vmatpush.bf16.msra.mxu0 %v203
  %221 = vmatpush.bf16.msra.mxu0 %v202
  %222 = vmatpush.bf16.msra.mxu0 %v201
  %223 = vmatpush.bf16.msra.mxu0 %v200
  %224 = vmatmul.bf16.gmra.mxu0 %v152
  %v225 = vpop.f32.mrf.mxu0
  %v226 = vadd.f32 0.0, %v225
  %v227 = vpop.f32.mrf.mxu0
  %v228 = vadd.f32 0.0, %v227
  %229 = vmatmul.bf16.gmra.mxu0 %v153
  %v230 = vpop.f32.mrf.mxu0
  %v231 = vadd.f32 0.0, %v230
  %v232 = vpop.f32.mrf.mxu0
  %v233 = vadd.f32 0.0, %v232
  %234 = vmatmul.bf16.gmra.mxu0 %v154
  %v235 = vpop.f32.mrf.mxu0
  %v236 = vadd.f32 0.0, %v235
  %v237 = vpop.f32.mrf.mxu0
  %v238 = vadd.f32 0.0, %v237
  %239 = vmatmul.bf16.gmra.mxu0 %v155
  %v240 = vpop.f32.mrf.mxu0
  %v241 = vadd.f32 0.0, %v240
  %v242 = vpop.f32.mrf.mxu0
  %v243 = vadd.f32 0.0, %v242
  %244 = vmatmul.bf16.gmra.mxu0 %v156
  %v245 = vpop.f32.mrf.mxu0
  %v246 = vadd.f32 0.0, %v245
  %v247 = vpop.f32.mrf.mxu0
  %v248 = vadd.f32 0.0, %v247
  %249 = vmatmul.bf16.gmra.mxu0 %v157
  %v250 = vpop.f32.mrf.mxu0
  %v251 = vadd.f32 0.0, %v250
  %v252 = vpop.f32.mrf.mxu0
  %v253 = vadd.f32 0.0, %v252
  %254 = vmatmul.bf16.gmra.mxu0 %v158
  %v255 = vpop.f32.mrf.mxu0
  %v256 = vadd.f32 0.0, %v255
  %v257 = vpop.f32.mrf.mxu0
  %v258 = vadd.f32 0.0, %v257
  %259 = vmatmul.bf16.gmra.mxu0 %v159
  %v260 = vpop.f32.mrf.mxu0
  %v261 = vadd.f32 0.0, %v260
  %v262 = vpop.f32.mrf.mxu0
  %v263 = vadd.f32 0.0, %v262
  %264 = vdwg.mxu0
  %v265 = vadd.f32 %v104, %v226
  %v266 = vadd.f32 %v105, %v228
  %v267 = vadd.f32 %v106, %v231
  %v268 = vadd.f32 %v107, %v233
  %v269 = vadd.f32 %v108, %v236
  %v270 = vadd.f32 %v109, %v238
  %v271 = vadd.f32 %v110, %v241
  %v272 = vadd.f32 %v111, %v243
  %v273 = vadd.f32 %v112, %v246
  %v274 = vadd.f32 %v113, %v248
  %v275 = vadd.f32 %v114, %v251
  %v276 = vadd.f32 %v115, %v253
  %v277 = vadd.f32 %v116, %v256
  %v278 = vadd.f32 %v117, %v258
  %v279 = vadd.f32 %v118, %v261
  %v280 = vadd.f32 %v119, %v263
  %vm281 = vcmask 261120
  %282 = vst.msk [vmem:[%s5] sm:$0xff] %vm281, %v265
  %283 = vst.msk [vmem:[%s5 + $0x8] sm:$0xff] %vm281, %v266
  %284 = vst.msk [vmem:[%s5 + $0x10] sm:$0xff] %vm281, %v267
  %285 = vst.msk [vmem:[%s5 + $0x18] sm:$0xff] %vm281, %v268
  %286 = vst.msk [vmem:[%s5 + $0x20] sm:$0xff] %vm281, %v269
  %287 = vst.msk [vmem:[%s5 + $0x28] sm:$0xff] %vm281, %v270
  %288 = vst.msk [vmem:[%s5 + $0x30] sm:$0xff] %vm281, %v271
  %289 = vst.msk [vmem:[%s5 + $0x38] sm:$0xff] %vm281, %v272
  %290 = vst.msk [vmem:[%s5 + $0x40] sm:$0xff] %vm281, %v273
  %291 = vst.msk [vmem:[%s5 + $0x48] sm:$0xff] %vm281, %v274
  %292 = vst.msk [vmem:[%s5 + $0x50] sm:$0xff] %vm281, %v275
  %293 = vst.msk [vmem:[%s5 + $0x58] sm:$0xff] %vm281, %v276
  %294 = vst.msk [vmem:[%s5 + $0x60] sm:$0xff] %vm281, %v277
  %295 = vst.msk [vmem:[%s5 + $0x68] sm:$0xff] %vm281, %v278
  %296 = vst.msk [vmem:[%s5 + $0x70] sm:$0xff] %vm281, %v279
  %297 = vst.msk [vmem:[%s5 + $0x78] sm:$0xff] %vm281, %v280
  %v298 = vld [vmem:[%s1] sm:$0xf]
  %v299 = vld [vmem:[%s1 + $0x4] sm:$0xf]
  %v300 = vld [vmem:[%s1 + $0x8] sm:$0xf]
  %v301 = vld [vmem:[%s1 + $0xc] sm:$0xf]
  %v302 = vld [vmem:[%s1 + $0x10] sm:$0xf]
  %v303 = vld [vmem:[%s1 + $0x14] sm:$0xf]
  %v304 = vld [vmem:[%s1 + $0x18] sm:$0xf]
  %v305 = vld [vmem:[%s1 + $0x1c] sm:$0xf]
  %v306 = vld [vmem:[%s1 + $0x20] sm:$0xf]
  %v307 = vld [vmem:[%s1 + $0x24] sm:$0xf]
  %v308 = vld [vmem:[%s1 + $0x28] sm:$0xf]
  %v309 = vld [vmem:[%s1 + $0x2c] sm:$0xf]
  %v310 = vld [vmem:[%s1 + $0x30] sm:$0xf]
  %v311 = vld [vmem:[%s1 + $0x34] sm:$0xf]
  %v312 = vld [vmem:[%s1 + $0x38] sm:$0xf]
  %v313 = vld [vmem:[%s1 + $0x3c] sm:$0xf]
  %314 = vxpose.xlu0.c.b16.start [1/8] %v152, 128
  %315 = vxpose.xlu0.c.b16.cont [2/8] %v153, 128
  %316 = vxpose.xlu0.c.b16.cont [3/8] %v154, 128
  %317 = vxpose.xlu0.c.b16.cont [4/8] %v155, 128
  %318 = vxpose.xlu0.c.b16.cont [5/8] %v156, 128
  %319 = vxpose.xlu0.c.b16.cont [6/8] %v157, 128
  %320 = vxpose.xlu0.c.b16.cont [7/8] %v158, 128
  %321 = vxpose.xlu0.c.b16.end [8/8] %v159, 128
  %v322 = vpop.trf.xlu0
  %v323 = vpop.trf.xlu0
  %v324 = vpop.trf.xlu0
  %v325 = vpop.trf.xlu0
  %v326 = vpop.trf.xlu0
  %v327 = vpop.trf.xlu0
  %v328 = vpop.trf.xlu0
  %v329 = vpop.trf.xlu0
  %v346 = vunpack.c.l.b16 %v298
  %v347 = vunpack.c.l.b16 %v299
  %v348 = vunpack.c.l.b16 %v300
  %v349 = vunpack.c.l.b16 %v301
  %v350 = vunpack.c.l.b16 %v302
  %v351 = vunpack.c.l.b16 %v303
  %v352 = vunpack.c.l.b16 %v304
  %v353 = vunpack.c.l.b16 %v305
  %v354 = vunpack.c.l.b16 %v306
  %v355 = vunpack.c.l.b16 %v307
  %v356 = vunpack.c.l.b16 %v308
  %v357 = vunpack.c.l.b16 %v309
  %v358 = vunpack.c.l.b16 %v310
  %v359 = vunpack.c.l.b16 %v311
  %v360 = vunpack.c.l.b16 %v312
  %v361 = vunpack.c.l.b16 %v313
  %v362 = vpack.c.b16 %v347, %v346
  %v363 = vpack.c.b16 %v349, %v348
  %v364 = vpack.c.b16 %v351, %v350
  %v365 = vpack.c.b16 %v353, %v352
  %v366 = vpack.c.b16 %v355, %v354
  %v367 = vpack.c.b16 %v357, %v356
  %v368 = vpack.c.b16 %v359, %v358
  %v369 = vpack.c.b16 %v361, %v360
  %378 = vmatpush.bf16.msra.mxu0 %v369
  %379 = vmatpush.bf16.msra.mxu0 %v368
  %380 = vmatpush.bf16.msra.mxu0 %v367
  %381 = vmatpush.bf16.msra.mxu0 %v366
  %382 = vmatpush.bf16.msra.mxu0 %v365
  %383 = vmatpush.bf16.msra.mxu0 %v364
  %384 = vmatpush.bf16.msra.mxu0 %v363
  %385 = vmatpush.bf16.msra.mxu0 %v362
  %386 = vmatmul.bf16.gmra.mxu0 %v322
  %v387 = vpop.f32.mrf.mxu0
  %v388 = vadd.f32 0.0, %v387
  %v389 = vpop.f32.mrf.mxu0
  %v390 = vadd.f32 0.0, %v389
  %391 = vmatmul.bf16.gmra.mxu0 %v323
  %v392 = vpop.f32.mrf.mxu0
  %v393 = vadd.f32 0.0, %v392
  %v394 = vpop.f32.mrf.mxu0
  %v395 = vadd.f32 0.0, %v394
  %396 = vmatmul.bf16.gmra.mxu0 %v324
  %v397 = vpop.f32.mrf.mxu0
  %v398 = vadd.f32 0.0, %v397
  %v399 = vpop.f32.mrf.mxu0
  %v400 = vadd.f32 0.0, %v399
  %401 = vmatmul.bf16.gmra.mxu0 %v325
  %v402 = vpop.f32.mrf.mxu0
  %v403 = vadd.f32 0.0, %v402
  %v404 = vpop.f32.mrf.mxu0
  %v405 = vadd.f32 0.0, %v404
  %406 = vmatmul.bf16.gmra.mxu0 %v326
  %v407 = vpop.f32.mrf.mxu0
  %v408 = vadd.f32 0.0, %v407
  %v409 = vpop.f32.mrf.mxu0
  %v410 = vadd.f32 0.0, %v409
  %411 = vmatmul.bf16.gmra.mxu0 %v327
  %v412 = vpop.f32.mrf.mxu0
  %v413 = vadd.f32 0.0, %v412
  %v414 = vpop.f32.mrf.mxu0
  %v415 = vadd.f32 0.0, %v414
  %416 = vmatmul.bf16.gmra.mxu0 %v328
  %v417 = vpop.f32.mrf.mxu0
  %v418 = vadd.f32 0.0, %v417
  %v419 = vpop.f32.mrf.mxu0
  %v420 = vadd.f32 0.0, %v419
  %421 = vmatmul.bf16.gmra.mxu0 %v329
  %v422 = vpop.f32.mrf.mxu0
  %v423 = vadd.f32 0.0, %v422
  %v424 = vpop.f32.mrf.mxu0
  %v425 = vadd.f32 0.0, %v424
  %426 = vdwg.mxu0
  %s427 = scalar_lea.vmem %s7, %s83
  %v428 = vld [vmem:[%s427] sm:$0xff]
  %v429 = vld [vmem:[%s427 + $0x8] sm:$0xff]
  %v430 = vld [vmem:[%s427 + $0x10] sm:$0xff]
  %v431 = vld [vmem:[%s427 + $0x18] sm:$0xff]
  %v432 = vld [vmem:[%s427 + $0x20] sm:$0xff]
  %v433 = vld [vmem:[%s427 + $0x28] sm:$0xff]
  %v434 = vld [vmem:[%s427 + $0x30] sm:$0xff]
  %v435 = vld [vmem:[%s427 + $0x38] sm:$0xff]
  %v436 = vld [vmem:[%s427 + $0x40] sm:$0xff]
  %v437 = vld [vmem:[%s427 + $0x48] sm:$0xff]
  %v438 = vld [vmem:[%s427 + $0x50] sm:$0xff]
  %v439 = vld [vmem:[%s427 + $0x58] sm:$0xff]
  %v440 = vld [vmem:[%s427 + $0x60] sm:$0xff]
  %v441 = vld [vmem:[%s427 + $0x68] sm:$0xff]
  %v442 = vld [vmem:[%s427 + $0x70] sm:$0xff]
  %v443 = vld [vmem:[%s427 + $0x78] sm:$0xff]
  %v444 = vadd.f32 %v428, %v388
  %v445 = vadd.f32 %v429, %v390
  %v446 = vadd.f32 %v430, %v393
  %v447 = vadd.f32 %v431, %v395
  %v448 = vadd.f32 %v432, %v398
  %v449 = vadd.f32 %v433, %v400
  %v450 = vadd.f32 %v434, %v403
  %v451 = vadd.f32 %v435, %v405
  %v452 = vadd.f32 %v436, %v408
  %v453 = vadd.f32 %v437, %v410
  %v454 = vadd.f32 %v438, %v413
  %v455 = vadd.f32 %v439, %v415
  %v456 = vadd.f32 %v440, %v418
  %v457 = vadd.f32 %v441, %v420
  %v458 = vadd.f32 %v442, %v423
  %v459 = vadd.f32 %v443, %v425
  %460 = vst.msk [vmem:[%s427] sm:$0xff] %vm281, %v444
  %461 = vst.msk [vmem:[%s427 + $0x8] sm:$0xff] %vm281, %v445
  %462 = vst.msk [vmem:[%s427 + $0x10] sm:$0xff] %vm281, %v446
  %463 = vst.msk [vmem:[%s427 + $0x18] sm:$0xff] %vm281, %v447
  %464 = vst.msk [vmem:[%s427 + $0x20] sm:$0xff] %vm281, %v448
  %465 = vst.msk [vmem:[%s427 + $0x28] sm:$0xff] %vm281, %v449
  %466 = vst.msk [vmem:[%s427 + $0x30] sm:$0xff] %vm281, %v450
  %467 = vst.msk [vmem:[%s427 + $0x38] sm:$0xff] %vm281, %v451
  %468 = vst.msk [vmem:[%s427 + $0x40] sm:$0xff] %vm281, %v452
  %469 = vst.msk [vmem:[%s427 + $0x48] sm:$0xff] %vm281, %v453
  %470 = vst.msk [vmem:[%s427 + $0x50] sm:$0xff] %vm281, %v454
  %471 = vst.msk [vmem:[%s427 + $0x58] sm:$0xff] %vm281, %v455
  %472 = vst.msk [vmem:[%s427 + $0x60] sm:$0xff] %vm281, %v456
  %473 = vst.msk [vmem:[%s427 + $0x68] sm:$0xff] %vm281, %v457
  %474 = vst.msk [vmem:[%s427 + $0x70] sm:$0xff] %vm281, %v458
  %475 = vst.msk [vmem:[%s427 + $0x78] sm:$0xff] %vm281, %v459
  // Predicated region
  $region30: #{gccf_forward.2} parent=0 // pred_check
    %p476 = pneg %p25
  $region31: #{gccf_forward.2} parent=0 // pred_check_branch
    %478 = sbr.rel (%p476) target = $region33
  $region32: #{gccf_forward.2} parent=0 // pred_region
    %v479 = vld [vmem:[%s5] sm:$0xff]
    %v480 = vld [vmem:[%s5 + $0x8] sm:$0xff]
    %v481 = vld [vmem:[%s5 + $0x10] sm:$0xff]
    %v482 = vld [vmem:[%s5 + $0x18] sm:$0xff]
    %v483 = vld [vmem:[%s5 + $0x20] sm:$0xff]
    %v484 = vld [vmem:[%s5 + $0x28] sm:$0xff]
    %v485 = vld [vmem:[%s5 + $0x30] sm:$0xff]
    %v486 = vld [vmem:[%s5 + $0x38] sm:$0xff]
    %v487 = vld [vmem:[%s5 + $0x40] sm:$0xff]
    %v488 = vld [vmem:[%s5 + $0x48] sm:$0xff]
    %v489 = vld [vmem:[%s5 + $0x50] sm:$0xff]
    %v490 = vld [vmem:[%s5 + $0x58] sm:$0xff]
    %v491 = vld [vmem:[%s5 + $0x60] sm:$0xff]
    %v492 = vld [vmem:[%s5 + $0x68] sm:$0xff]
    %v493 = vld [vmem:[%s5 + $0x70] sm:$0xff]
    %v494 = vld [vmem:[%s5 + $0x78] sm:$0xff]
    %v495 = vmax.f32 %v479, 0.0
    %v496 = vmax.f32 %v480, 0.0
    %v497 = vmax.f32 %v481, 0.0
    %v498 = vmax.f32 %v482, 0.0
    %v499 = vmax.f32 %v483, 0.0
    %v500 = vmax.f32 %v484, 0.0
    %v501 = vmax.f32 %v485, 0.0
    %v502 = vmax.f32 %v486, 0.0
    %v503 = vmax.f32 %v487, 0.0
    %v504 = vmax.f32 %v488, 0.0
    %v505 = vmax.f32 %v489, 0.0
    %v506 = vmax.f32 %v490, 0.0
    %v507 = vmax.f32 %v491, 0.0
    %v508 = vmax.f32 %v492, 0.0
    %v509 = vmax.f32 %v493, 0.0
    %v510 = vmax.f32 %v494, 0.0
    %511 = vst.msk [vmem:[%s5] sm:$0xff] %vm281, %v495
    %512 = vst.msk [vmem:[%s5 + $0x8] sm:$0xff] %vm281, %v496
    %513 = vst.msk [vmem:[%s5 + $0x10] sm:$0xff] %vm281, %v497
    %514 = vst.msk [vmem:[%s5 + $0x18] sm:$0xff] %vm281, %v498
    %515 = vst.msk [vmem:[%s5 + $0x20] sm:$0xff] %vm281, %v499
    %516 = vst.msk [vmem:[%s5 + $0x28] sm:$0xff] %vm281, %v500
    %517 = vst.msk [vmem:[%s5 + $0x30] sm:$0xff] %vm281, %v501
    %518 = vst.msk [vmem:[%s5 + $0x38] sm:$0xff] %vm281, %v502
    %519 = vst.msk [vmem:[%s5 + $0x40] sm:$0xff] %vm281, %v503
    %520 = vst.msk [vmem:[%s5 + $0x48] sm:$0xff] %vm281, %v504
    %521 = vst.msk [vmem:[%s5 + $0x50] sm:$0xff] %vm281, %v505
    %522 = vst.msk [vmem:[%s5 + $0x58] sm:$0xff] %vm281, %v506
    %523 = vst.msk [vmem:[%s5 + $0x60] sm:$0xff] %vm281, %v507
    %524 = vst.msk [vmem:[%s5 + $0x68] sm:$0xff] %vm281, %v508
    %525 = vst.msk [vmem:[%s5 + $0x70] sm:$0xff] %vm281, %v509
    %526 = vst.msk [vmem:[%s5 + $0x78] sm:$0xff] %vm281, %v510
    %v527 = vld [vmem:[%s3] sm:$0xff]
    %v528 = vld [vmem:[%s3 + $0x8] sm:$0xff]
    %v529 = vld [vmem:[%s3 + $0x10] sm:$0xff]
    %v530 = vld [vmem:[%s3 + $0x18] sm:$0xff]
    %v531 = vld [vmem:[%s3 + $0x20] sm:$0xff]
    %v532 = vld [vmem:[%s3 + $0x28] sm:$0xff]
    %v533 = vld [vmem:[%s3 + $0x30] sm:$0xff]
    %v534 = vld [vmem:[%s3 + $0x38] sm:$0xff]
    %v535 = vld [vmem:[%s3 + $0x40] sm:$0xff]
    %v536 = vld [vmem:[%s3 + $0x48] sm:$0xff]
    %v537 = vld [vmem:[%s3 + $0x50] sm:$0xff]
    %v538 = vld [vmem:[%s3 + $0x58] sm:$0xff]
    %v539 = vld [vmem:[%s3 + $0x60] sm:$0xff]
    %v540 = vld [vmem:[%s3 + $0x68] sm:$0xff]
    %v541 = vld [vmem:[%s3 + $0x70] sm:$0xff]
    %v542 = vld [vmem:[%s3 + $0x78] sm:$0xff]
    %v543 = vadd.f32 %v527, %v495
    %v544 = vadd.f32 %v528, %v496
    %v545 = vadd.f32 %v529, %v497
    %v546 = vadd.f32 %v530, %v498
    %v547 = vadd.f32 %v531, %v499
    %v548 = vadd.f32 %v532, %v500
    %v549 = vadd.f32 %v533, %v501
    %v550 = vadd.f32 %v534, %v502
    %v551 = vadd.f32 %v535, %v503
    %v552 = vadd.f32 %v536, %v504
    %v553 = vadd.f32 %v537, %v505
    %v554 = vadd.f32 %v538, %v506
    %v555 = vadd.f32 %v539, %v507
    %v556 = vadd.f32 %v540, %v508
    %v557 = vadd.f32 %v541, %v509
    %v558 = vadd.f32 %v542, %v510
    %559 = vst.msk [vmem:[%s6] sm:$0xff] %vm281, %v543
    %560 = vst.msk [vmem:[%s6 + $0x8] sm:$0xff] %vm281, %v544
    %561 = vst.msk [vmem:[%s6 + $0x10] sm:$0xff] %vm281, %v545
    %562 = vst.msk [vmem:[%s6 + $0x18] sm:$0xff] %vm281, %v546
    %563 = vst.msk [vmem:[%s6 + $0x20] sm:$0xff] %vm281, %v547
    %564 = vst.msk [vmem:[%s6 + $0x28] sm:$0xff] %vm281, %v548
    %565 = vst.msk [vmem:[%s6 + $0x30] sm:$0xff] %vm281, %v549
    %566 = vst.msk [vmem:[%s6 + $0x38] sm:$0xff] %vm281, %v550
    %567 = vst.msk [vmem:[%s6 + $0x40] sm:$0xff] %vm281, %v551
    %568 = vst.msk [vmem:[%s6 + $0x48] sm:$0xff] %vm281, %v552
    %569 = vst.msk [vmem:[%s6 + $0x50] sm:$0xff] %vm281, %v553
    %570 = vst.msk [vmem:[%s6 + $0x58] sm:$0xff] %vm281, %v554
    %571 = vst.msk [vmem:[%s6 + $0x60] sm:$0xff] %vm281, %v555
    %572 = vst.msk [vmem:[%s6 + $0x68] sm:$0xff] %vm281, %v556
    %573 = vst.msk [vmem:[%s6 + $0x70] sm:$0xff] %vm281, %v557
    %574 = vst.msk [vmem:[%s6 + $0x78] sm:$0xff] %vm281, %v558
  $region33: #{gccf_forward.2} parent=0 // pred_fallthru
    _
  // Predicated region
  $region34: #{gccf_forward.2} parent=0 // pred_check
    _
  $region35: #{gccf_forward.2} parent=0 // pred_check_branch
    %576 = sbr.rel (%p26) target = $region37
  $region36: #{gccf_forward.2} parent=0 // pred_region
    %v577 = vld [vmem:[%s7] sm:$0xff]
    %v578 = vld [vmem:[%s7 + $0x8] sm:$0xff]
    %v579 = vld [vmem:[%s7 + $0x10] sm:$0xff]
    %v580 = vld [vmem:[%s7 + $0x18] sm:$0xff]
    %v581 = vld [vmem:[%s7 + $0x20] sm:$0xff]
    %v582 = vld [vmem:[%s7 + $0x28] sm:$0xff]
    %v583 = vld [vmem:[%s7 + $0x30] sm:$0xff]
    %v584 = vld [vmem:[%s7 + $0x38] sm:$0xff]
    %v585 = vld [vmem:[%s7 + $0x40] sm:$0xff]
    %v586 = vld [vmem:[%s7 + $0x48] sm:$0xff]
    %v587 = vld [vmem:[%s7 + $0x50] sm:$0xff]
    %v588 = vld [vmem:[%s7 + $0x58] sm:$0xff]
    %v589 = vld [vmem:[%s7 + $0x60] sm:$0xff]
    %v590 = vld [vmem:[%s7 + $0x68] sm:$0xff]
    %v591 = vld [vmem:[%s7 + $0x70] sm:$0xff]
    %v592 = vld [vmem:[%s7 + $0x78] sm:$0xff]
    %v593 = vmax.f32 %v577, 0.0
    %v594 = vmax.f32 %v578, 0.0
    %v595 = vmax.f32 %v579, 0.0
    %v596 = vmax.f32 %v580, 0.0
    %v597 = vmax.f32 %v581, 0.0
    %v598 = vmax.f32 %v582, 0.0
    %v599 = vmax.f32 %v583, 0.0
    %v600 = vmax.f32 %v584, 0.0
    %v601 = vmax.f32 %v585, 0.0
    %v602 = vmax.f32 %v586, 0.0
    %v603 = vmax.f32 %v587, 0.0
    %v604 = vmax.f32 %v588, 0.0
    %v605 = vmax.f32 %v589, 0.0
    %v606 = vmax.f32 %v590, 0.0
    %v607 = vmax.f32 %v591, 0.0
    %v608 = vmax.f32 %v592, 0.0
    %609 = vst.msk [vmem:[%s7] sm:$0xff] %vm281, %v593
    %610 = vst.msk [vmem:[%s7 + $0x8] sm:$0xff] %vm281, %v594
    %611 = vst.msk [vmem:[%s7 + $0x10] sm:$0xff] %vm281, %v595
    %612 = vst.msk [vmem:[%s7 + $0x18] sm:$0xff] %vm281, %v596
    %613 = vst.msk [vmem:[%s7 + $0x20] sm:$0xff] %vm281, %v597
    %614 = vst.msk [vmem:[%s7 + $0x28] sm:$0xff] %vm281, %v598
    %615 = vst.msk [vmem:[%s7 + $0x30] sm:$0xff] %vm281, %v599
    %616 = vst.msk [vmem:[%s7 + $0x38] sm:$0xff] %vm281, %v600
    %617 = vst.msk [vmem:[%s7 + $0x40] sm:$0xff] %vm281, %v601
    %618 = vst.msk [vmem:[%s7 + $0x48] sm:$0xff] %vm281, %v602
    %619 = vst.msk [vmem:[%s7 + $0x50] sm:$0xff] %vm281, %v603
    %620 = vst.msk [vmem:[%s7 + $0x58] sm:$0xff] %vm281, %v604
    %621 = vst.msk [vmem:[%s7 + $0x60] sm:$0xff] %vm281, %v605
    %622 = vst.msk [vmem:[%s7 + $0x68] sm:$0xff] %vm281, %v606
    %623 = vst.msk [vmem:[%s7 + $0x70] sm:$0xff] %vm281, %v607
    %624 = vst.msk [vmem:[%s7 + $0x78] sm:$0xff] %vm281, %v608
    %v625 = vld [vmem:[%s4] sm:$0xff]
    %v626 = vld [vmem:[%s4 + $0x8] sm:$0xff]
    %v627 = vld [vmem:[%s4 + $0x10] sm:$0xff]
    %v628 = vld [vmem:[%s4 + $0x18] sm:$0xff]
    %v629 = vld [vmem:[%s4 + $0x20] sm:$0xff]
    %v630 = vld [vmem:[%s4 + $0x28] sm:$0xff]
    %v631 = vld [vmem:[%s4 + $0x30] sm:$0xff]
    %v632 = vld [vmem:[%s4 + $0x38] sm:$0xff]
    %v633 = vld [vmem:[%s4 + $0x40] sm:$0xff]
    %v634 = vld [vmem:[%s4 + $0x48] sm:$0xff]
    %v635 = vld [vmem:[%s4 + $0x50] sm:$0xff]
    %v636 = vld [vmem:[%s4 + $0x58] sm:$0xff]
    %v637 = vld [vmem:[%s4 + $0x60] sm:$0xff]
    %v638 = vld [vmem:[%s4 + $0x68] sm:$0xff]
    %v639 = vld [vmem:[%s4 + $0x70] sm:$0xff]
    %v640 = vld [vmem:[%s4 + $0x78] sm:$0xff]
    %v641 = vadd.f32 %v625, %v593
    %v642 = vadd.f32 %v626, %v594
    %v643 = vadd.f32 %v627, %v595
    %v644 = vadd.f32 %v628, %v596
    %v645 = vadd.f32 %v629, %v597
    %v646 = vadd.f32 %v630, %v598
    %v647 = vadd.f32 %v631, %v599
    %v648 = vadd.f32 %v632, %v600
    %v649 = vadd.f32 %v633, %v601
    %v650 = vadd.f32 %v634, %v602
    %v651 = vadd.f32 %v635, %v603
    %v652 = vadd.f32 %v636, %v604
    %v653 = vadd.f32 %v637, %v605
    %v654 = vadd.f32 %v638, %v606
    %v655 = vadd.f32 %v639, %v607
    %v656 = vadd.f32 %v640, %v608
    %657 = vst.msk [vmem:[%s8] sm:$0xff] %vm281, %v641
    %658 = vst.msk [vmem:[%s8 + $0x8] sm:$0xff] %vm281, %v642
    %659 = vst.msk [vmem:[%s8 + $0x10] sm:$0xff] %vm281, %v643
    %660 = vst.msk [vmem:[%s8 + $0x18] sm:$0xff] %vm281, %v644
    %661 = vst.msk [vmem:[%s8 + $0x20] sm:$0xff] %vm281, %v645
    %662 = vst.msk [vmem:[%s8 + $0x28] sm:$0xff] %vm281, %v646
    %663 = vst.msk [vmem:[%s8 + $0x30] sm:$0xff] %vm281, %v647
    %664 = vst.msk [vmem:[%s8 + $0x38] sm:$0xff] %vm281, %v648
    %665 = vst.msk [vmem:[%s8 + $0x40] sm:$0xff] %vm281, %v649
    %666 = vst.msk [vmem:[%s8 + $0x48] sm:$0xff] %vm281, %v650
    %667 = vst.msk [vmem:[%s8 + $0x50] sm:$0xff] %vm281, %v651
    %668 = vst.msk [vmem:[%s8 + $0x58] sm:$0xff] %vm281, %v652
    %669 = vst.msk [vmem:[%s8 + $0x60] sm:$0xff] %vm281, %v653
    %670 = vst.msk [vmem:[%s8 + $0x68] sm:$0xff] %vm281, %v654
    %671 = vst.msk [vmem:[%s8 + $0x70] sm:$0xff] %vm281, %v655
    %672 = vst.msk [vmem:[%s8 + $0x78] sm:$0xff] %vm281, %v656
  $region37: #{gccf_forward.2} parent=0 // pred_fallthru
    _
  // Predicated region
  $region38: #{gccf_forward.2} parent=0 // pred_check
    _
  $region39: #{gccf_forward.2} parent=0 // pred_check_branch
    %674 = sbr.rel (0) target = $region41
  $region40: #{gccf_forward.2} parent=0 // pred_region
    _
  $region41: #{gccf_forward.2} parent=0 // pred_fallthru
    _
  // Predicated region
  $region42: #{gccf_forward.2} parent=0 // pred_check
    _
  $region43: #{gccf_forward.2} parent=0 // pred_check_branch
    %676 = sbr.rel (0) target = $region45
  $region44: #{gccf_forward.2} parent=0 // pred_region
    _
  $region45: #{gccf_forward.2} parent=0 // pred_fallthru
    _
  // Predicated region
  $region46: #{gccf_forward.2} parent=0 // pred_check
    _
  $region47: #{gccf_forward.2} parent=0 // pred_check_branch
    %678 = sbr.rel (0) target = $region49
  $region48: #{gccf_forward.2} parent=0 // pred_region
    _
  $region49: #{gccf_forward.2} parent=0 // pred_fallthru
    _
  // Predicated region
  $region50: #{gccf_forward.2} parent=0 // pred_check
    _
  $region51: #{gccf_forward.2} parent=0 // pred_check_branch
    %680 = sbr.rel (0) target = $region53
  $region52: #{gccf_forward.2} parent=0 // pred_region
    _
  $region53: #{gccf_forward.2} parent=0 // pred_fallthru
    _
  // Predicated region
  $region54: #{gccf_forward.2} parent=0 // pred_check
    _
  $region55: #{gccf_forward.2} parent=0 // pred_check_branch
    %682 = sbr.rel (0) target = $region57
  $region56: #{gccf_forward.2} parent=0 // pred_region
    _
  $region57: #{gccf_forward.2} parent=0 // pred_fallthru
    _
  // Predicated region
  $region58: #{gccf_forward.2} parent=0 // pred_check
    _
  $region59: #{gccf_forward.2} parent=0 // pred_check_branch
    %684 = sbr.rel (0) target = $region61
  $region60: #{gccf_forward.2} parent=0 // pred_region
    _
  $region61: #{gccf_forward.2} parent=0 // pred_fallthru
    _
  // Predicated region
  $region62: #{gccf_forward.2} parent=0 // pred_check
    _
  $region63: #{gccf_forward.2} parent=0 // pred_check_branch
    %686 = sbr.rel (0) target = $region65
  $region64: #{gccf_forward.2} parent=0 // pred_region
    _
  $region65: #{gccf_forward.2} parent=0 // pred_fallthru
    _
  // Predicated region
  $region66: #{gccf_forward.2} parent=0 // pred_check
    _
  $region67: #{gccf_forward.2} parent=0 // pred_check_branch
    %688 = sbr.rel (0) target = $region69
  $region68: #{gccf_forward.2} parent=0 // pred_region
    _
  $region69: #{gccf_forward.2} parent=0 // pred_fallthru
    _

// kernel: gccf_forward.3
$region0: #{gccf_forward.3}
  #allocation0 [shape = 'u32[]', space=smem, size = 0x4, offset = 0x4, fixed_abs, tag = 'smem constant byte address 0x4 - core index']
  #allocation1 [shape = 'u32[72,128]{1,0:T(1,128)}', space=vmem, size = 0x9000, scoped, tag = 'internal scratch']
  %s0 = inlined_call_operand.vmem [shape: bf16[128,128], index: 0, kind: input, shape index: {}]
  %s1 = inlined_call_operand.vmem [shape: bf16[128,32], index: 1, kind: input, shape index: {}]
  %s2 = inlined_call_operand.vmem [shape: bf16[128,32], index: 2, kind: input, shape index: {}]
  %s3 = inlined_call_operand.vmem [shape: f32[128,32], index: 3, kind: input, shape index: {}, may-alias: {3,6}]
  %s4 = inlined_call_operand.vmem [shape: f32[128,32], index: 4, kind: input, shape index: {}, may-alias: {4,8}]
  %s5 = inlined_call_operand.hbm [shape: f32[128,32], index: 5, kind: output, shape index: {0}]
  %s6 = inlined_call_operand.vmem [shape: f32[128,32], index: 6, kind: output, shape index: {1}, may-alias: {3,6}]
  %s7 = inlined_call_operand.hbm [shape: f32[128,32], index: 7, kind: output, shape index: {2}]
  %s8 = inlined_call_operand.vmem [shape: f32[128,32], index: 8, kind: output, shape index: {3}, may-alias: {4,8}]
  %9 = xla_tuple %s5, %s6, %s7, %s8
  %s10 = sld [smem:[#allocation0]]
  $region70: #{gccf_forward.3} parent=0
    _
  %s12 = ssub.s32 1, %s10
  %s13 = scalar_select 0, %s12, %s10
  $region1: #{gccf_forward.3} parent=0
    #allocation2 [shape = 'u8[65536]{0}', space=vmem, size = 0x10000, scoped, tag = 'output window, operand 0, single buffered']
    #allocation3 [shape = 's32[1]{0}', space=sflag, size = 0x4, scoped, tag = 'scoped memory for gccf_forward.3']
    #allocation4 [shape = 'u8[65536]{0}', space=vmem, size = 0x10000, scoped, tag = 'output window, operand 2, single buffered']
    #allocation5 [shape = 's32[1]{0}', space=sflag, size = 0x4, scoped, tag = 'scoped memory for gccf_forward.3']
    %14 = vsyncpa [#allocation3], 0
    %15 = vsyncpa [#allocation5], 0
    // Predicated region
    $region2: #{gccf_forward.3} parent=1 // pred_check
      _
    $region3: #{gccf_forward.3} parent=1 // pred_check_branch
      %17 = sbr.rel (0) target = $region5
    $region4: #{gccf_forward.3} parent=1 // pred_region
      _
    $region5: #{gccf_forward.3} parent=1 // pred_fallthru
      _
    // Predicated region
    $region6: #{gccf_forward.3} parent=1 // pred_check
      _
    $region7: #{gccf_forward.3} parent=1 // pred_check_branch
      %19 = sbr.rel (0) target = $region9
    $region8: #{gccf_forward.3} parent=1 // pred_region
      _
    $region9: #{gccf_forward.3} parent=1 // pred_fallthru
      _
    // Predicated region
    $region10: #{gccf_forward.3} parent=1 // pred_check
      _
    $region11: #{gccf_forward.3} parent=1 // pred_check_branch
      %21 = sbr.rel (0) target = $region13
    $region12: #{gccf_forward.3} parent=1 // pred_region
      _
    $region13: #{gccf_forward.3} parent=1 // pred_fallthru
      _
    // Predicated region
    $region14: #{gccf_forward.3} parent=1 // pred_check
      _
    $region15: #{gccf_forward.3} parent=1 // pred_check_branch
      %23 = sbr.rel (0) target = $region17
    $region16: #{gccf_forward.3} parent=1 // pred_region
      _
    $region17: #{gccf_forward.3} parent=1 // pred_fallthru
      _
    // Predicated region
    $region18: #{gccf_forward.3} parent=1 // pred_check
      _
    $region19: #{gccf_forward.3} parent=1 // pred_check_branch
      %25 = sbr.rel (0) target = $region21
    $region20: #{gccf_forward.3} parent=1 // pred_region
      _
    $region21: #{gccf_forward.3} parent=1 // pred_fallthru
      _
    %p26 = scmp.eq.s32.totalorder 0, 0
    %p27 = scmp.eq.s32.totalorder 0, 0
    %p28 = pnand %p26, %p27
    %p29 = pneg %p28
    // Predicated region
    $region22: #{gccf_forward.3} parent=1 // pred_check
      _
    $region23: #{gccf_forward.3} parent=1 // pred_check_branch
      %31 = sbr.rel (%p28) target = $region25
    $region24: #{gccf_forward.3} parent=1 // pred_region
      %vm32 = vcmask 261120
      %33 = vst.msk [vmem:[#allocation4] sm:$0xff] %vm32, 0.0
      %34 = vst.msk [vmem:[#allocation4 + $0x8] sm:$0xff] %vm32, 0.0
      %35 = vst.msk [vmem:[#allocation4 + $0x10] sm:$0xff] %vm32, 0.0
      %36 = vst.msk [vmem:[#allocation4 + $0x18] sm:$0xff] %vm32, 0.0
      %37 = vst.msk [vmem:[#allocation4 + $0x20] sm:$0xff] %vm32, 0.0
      %38 = vst.msk [vmem:[#allocation4 + $0x28] sm:$0xff] %vm32, 0.0
      %39 = vst.msk [vmem:[#allocation4 + $0x30] sm:$0xff] %vm32, 0.0
      %40 = vst.msk [vmem:[#allocation4 + $0x38] sm:$0xff] %vm32, 0.0
      %41 = vst.msk [vmem:[#allocation4 + $0x40] sm:$0xff] %vm32, 0.0
      %42 = vst.msk [vmem:[#allocation4 + $0x48] sm:$0xff] %vm32, 0.0
      %43 = vst.msk [vmem:[#allocation4 + $0x50] sm:$0xff] %vm32, 0.0
      %44 = vst.msk [vmem:[#allocation4 + $0x58] sm:$0xff] %vm32, 0.0
      %45 = vst.msk [vmem:[#allocation4 + $0x60] sm:$0xff] %vm32, 0.0
      %46 = vst.msk [vmem:[#allocation4 + $0x68] sm:$0xff] %vm32, 0.0
      %47 = vst.msk [vmem:[#allocation4 + $0x70] sm:$0xff] %vm32, 0.0
      %48 = vst.msk [vmem:[#allocation4 + $0x78] sm:$0xff] %vm32, 0.0
    $region25: #{gccf_forward.3} parent=1 // pred_fallthru
      _
    // Predicated region
    $region26: #{gccf_forward.3} parent=1 // pred_check
      %p49 = pneg %p27
    $region27: #{gccf_forward.3} parent=1 // pred_check_branch
      %51 = sbr.rel (%p49) target = $region29
    $region28: #{gccf_forward.3} parent=1 // pred_region
      %vm52 = vcmask 261120
      %53 = vst.msk [vmem:[#allocation2] sm:$0xff] %vm52, 0.0
      %54 = vst.msk [vmem:[#allocation2 + $0x8] sm:$0xff] %vm52, 0.0
      %55 = vst.msk [vmem:[#allocation2 + $0x10] sm:$0xff] %vm52, 0.0
      %56 = vst.msk [vmem:[#allocation2 + $0x18] sm:$0xff] %vm52, 0.0
      %57 = vst.msk [vmem:[#allocation2 + $0x20] sm:$0xff] %vm52, 0.0
      %58 = vst.msk [vmem:[#allocation2 + $0x28] sm:$0xff] %vm52, 0.0
      %59 = vst.msk [vmem:[#allocation2 + $0x30] sm:$0xff] %vm52, 0.0
      %60 = vst.msk [vmem:[#allocation2 + $0x38] sm:$0xff] %vm52, 0.0
      %61 = vst.msk [vmem:[#allocation2 + $0x40] sm:$0xff] %vm52, 0.0
      %62 = vst.msk [vmem:[#allocation2 + $0x48] sm:$0xff] %vm52, 0.0
      %63 = vst.msk [vmem:[#allocation2 + $0x50] sm:$0xff] %vm52, 0.0
      %64 = vst.msk [vmem:[#allocation2 + $0x58] sm:$0xff] %vm52, 0.0
      %65 = vst.msk [vmem:[#allocation2 + $0x60] sm:$0xff] %vm52, 0.0
      %66 = vst.msk [vmem:[#allocation2 + $0x68] sm:$0xff] %vm52, 0.0
      %67 = vst.msk [vmem:[#allocation2 + $0x70] sm:$0xff] %vm52, 0.0
      %68 = vst.msk [vmem:[#allocation2 + $0x78] sm:$0xff] %vm52, 0.0
    $region29: #{gccf_forward.3} parent=1 // pred_fallthru
      _
    %v69 = vld [vmem:[%s0] sm:$0xf]
    %v70 = vld [vmem:[%s0 + $0x4] sm:$0xf]
    %v71 = vld [vmem:[%s0 + $0x8] sm:$0xf]
    %v72 = vld [vmem:[%s0 + $0xc] sm:$0xf]
    %v73 = vld [vmem:[%s0 + $0x10] sm:$0xf]
    %v74 = vld [vmem:[%s0 + $0x14] sm:$0xf]
    %v75 = vld [vmem:[%s0 + $0x18] sm:$0xf]
    %v76 = vld [vmem:[%s0 + $0x1c] sm:$0xf]
    %v77 = vld [vmem:[%s0 + $0x20] sm:$0xf]
    %v78 = vld [vmem:[%s0 + $0x24] sm:$0xf]
    %v79 = vld [vmem:[%s0 + $0x28] sm:$0xf]
    %v80 = vld [vmem:[%s0 + $0x2c] sm:$0xf]
    %v81 = vld [vmem:[%s0 + $0x30] sm:$0xf]
    %v82 = vld [vmem:[%s0 + $0x34] sm:$0xf]
    %v83 = vld [vmem:[%s0 + $0x38] sm:$0xf]
    %v84 = vld [vmem:[%s0 + $0x3c] sm:$0xf]
    %s85 = smul.u32 0, 128
    %s86 = sshra.s32 %s85, 3
    %s87 = sand.u32 %s85, 7
    %s88 = smul.addr %s86, 4
    %s89 = scalar_lea.vmem %s2, %s88
    %v90 = vld [vmem:[%s89] sm:$0xf]
    %v91 = vld [vmem:[%s89 + $0x4] sm:$0xf]
    %v92 = vld [vmem:[%s89 + $0x8] sm:$0xf]
    %v93 = vld [vmem:[%s89 + $0xc] sm:$0xf]
    %v94 = vld [vmem:[%s89 + $0x10] sm:$0xf]
    %v95 = vld [vmem:[%s89 + $0x14] sm:$0xf]
    %v96 = vld [vmem:[%s89 + $0x18] sm:$0xf]
    %v97 = vld [vmem:[%s89 + $0x1c] sm:$0xf]
    %v98 = vld [vmem:[%s89 + $0x20] sm:$0xf]
    %v99 = vld [vmem:[%s89 + $0x24] sm:$0xf]
    %v100 = vld [vmem:[%s89 + $0x28] sm:$0xf]
    %v101 = vld [vmem:[%s89 + $0x2c] sm:$0xf]
    %v102 = vld [vmem:[%s89 + $0x30] sm:$0xf]
    %v103 = vld [vmem:[%s89 + $0x34] sm:$0xf]
    %v104 = vld [vmem:[%s89 + $0x38] sm:$0xf]
    %v105 = vld [vmem:[%s89 + $0x3c] sm:$0xf]
    %v106 = vld [vmem:[#allocation2] sm:$0xff]
    %v107 = vld [vmem:[#allocation2 + $0x8] sm:$0xff]
    %v108 = vld [vmem:[#allocation2 + $0x10] sm:$0xff]
    %v109 = vld [vmem:[#allocation2 + $0x18] sm:$0xff]
    %v110 = vld [vmem:[#allocation2 + $0x20] sm:$0xff]
    %v111 = vld [vmem:[#allocation2 + $0x28] sm:$0xff]
    %v112 = vld [vmem:[#allocation2 + $0x30] sm:$0xff]
    %v113 = vld [vmem:[#allocation2 + $0x38] sm:$0xff]
    %v114 = vld [vmem:[#allocation2 + $0x40] sm:$0xff]
    %v115 = vld [vmem:[#allocation2 + $0x48] sm:$0xff]
    %v116 = vld [vmem:[#allocation2 + $0x50] sm:$0xff]
    %v117 = vld [vmem:[#allocation2 + $0x58] sm:$0xff]
    %v118 = vld [vmem:[#allocation2 + $0x60] sm:$0xff]
    %v119 = vld [vmem:[#allocation2 + $0x68] sm:$0xff]
    %v120 = vld [vmem:[#allocation2 + $0x70] sm:$0xff]
    %v121 = vld [vmem:[#allocation2 + $0x78] sm:$0xff]
    %v138 = vunpack.c.l.b16 %v69
    %v139 = vunpack.c.l.b16 %v70
    %v140 = vunpack.c.l.b16 %v71
    %v141 = vunpack.c.l.b16 %v72
    %v142 = vunpack.c.l.b16 %v73
    %v143 = vunpack.c.l.b16 %v74
    %v144 = vunpack.c.l.b16 %v75
    %v145 = vunpack.c.l.b16 %v76
    %v146 = vunpack.c.l.b16 %v77
    %v147 = vunpack.c.l.b16 %v78
    %v148 = vunpack.c.l.b16 %v79
    %v149 = vunpack.c.l.b16 %v80
    %v150 = vunpack.c.l.b16 %v81
    %v151 = vunpack.c.l.b16 %v82
    %v152 = vunpack.c.l.b16 %v83
    %v153 = vunpack.c.l.b16 %v84
    %v154 = vpack.c.b16 %v139, %v138
    %v155 = vpack.c.b16 %v141, %v140
    %v156 = vpack.c.b16 %v143, %v142
    %v157 = vpack.c.b16 %v145, %v144
    %v158 = vpack.c.b16 %v147, %v146
    %v159 = vpack.c.b16 %v149, %v148
    %v160 = vpack.c.b16 %v151, %v150
    %v161 = vpack.c.b16 %v153, %v152
    %v186 = vunpack.c.l.b16 %v90
    %v187 = vunpack.c.l.b16 %v91
    %v188 = vunpack.c.l.b16 %v92
    %v189 = vunpack.c.l.b16 %v93
    %v190 = vunpack.c.l.b16 %v94
    %v191 = vunpack.c.l.b16 %v95
    %v192 = vunpack.c.l.b16 %v96
    %v193 = vunpack.c.l.b16 %v97
    %v194 = vunpack.c.l.b16 %v98
    %v195 = vunpack.c.l.b16 %v99
    %v196 = vunpack.c.l.b16 %v100
    %v197 = vunpack.c.l.b16 %v101
    %v198 = vunpack.c.l.b16 %v102
    %v199 = vunpack.c.l.b16 %v103
    %v200 = vunpack.c.l.b16 %v104
    %v201 = vunpack.c.l.b16 %v105
    %v202 = vpack.c.b16 %v187, %v186
    %v203 = vpack.c.b16 %v189, %v188
    %v204 = vpack.c.b16 %v191, %v190
    %v205 = vpack.c.b16 %v193, %v192
    %v206 = vpack.c.b16 %v195, %v194
    %v207 = vpack.c.b16 %v197, %v196
    %v208 = vpack.c.b16 %v199, %v198
    %v209 = vpack.c.b16 %v201, %v200
    %218 = vmatpush.bf16.msra.mxu0 %v209
    %219 = vmatpush.bf16.msra.mxu0 %v208
    %220 = vmatpush.bf16.msra.mxu0 %v207
    %221 = vmatpush.bf16.msra.mxu0 %v206
    %222 = vmatpush.bf16.msra.mxu0 %v205
    %223 = vmatpush.bf16.msra.mxu0 %v204
    %224 = vmatpush.bf16.msra.mxu0 %v203
    %225 = vmatpush.bf16.msra.mxu0 %v202
    %226 = vmatmul.bf16.gmra.mxu0 %v154
    %v227 = vpop.f32.mrf.mxu0
    %v228 = vadd.f32 0.0, %v227
    %v229 = vpop.f32.mrf.mxu0
    %v230 = vadd.f32 0.0, %v229
    %231 = vmatmul.bf16.gmra.mxu0 %v155
    %v232 = vpop.f32.mrf.mxu0
    %v233 = vadd.f32 0.0, %v232
    %v234 = vpop.f32.mrf.mxu0
    %v235 = vadd.f32 0.0, %v234
    %236 = vmatmul.bf16.gmra.mxu0 %v156
    %v237 = vpop.f32.mrf.mxu0
    %v238 = vadd.f32 0.0, %v237
    %v239 = vpop.f32.mrf.mxu0
    %v240 = vadd.f32 0.0, %v239
    %241 = vmatmul.bf16.gmra.mxu0 %v157
    %v242 = vpop.f32.mrf.mxu0
    %v243 = vadd.f32 0.0, %v242
    %v244 = vpop.f32.mrf.mxu0
    %v245 = vadd.f32 0.0, %v244
    %246 = vmatmul.bf16.gmra.mxu0 %v158
    %v247 = vpop.f32.mrf.mxu0
    %v248 = vadd.f32 0.0, %v247
    %v249 = vpop.f32.mrf.mxu0
    %v250 = vadd.f32 0.0, %v249
    %251 = vmatmul.bf16.gmra.mxu0 %v159
    %v252 = vpop.f32.mrf.mxu0
    %v253 = vadd.f32 0.0, %v252
    %v254 = vpop.f32.mrf.mxu0
    %v255 = vadd.f32 0.0, %v254
    %256 = vmatmul.bf16.gmra.mxu0 %v160
    %v257 = vpop.f32.mrf.mxu0
    %v258 = vadd.f32 0.0, %v257
    %v259 = vpop.f32.mrf.mxu0
    %v260 = vadd.f32 0.0, %v259
    %261 = vmatmul.bf16.gmra.mxu0 %v161
    %v262 = vpop.f32.mrf.mxu0
    %v263 = vadd.f32 0.0, %v262
    %v264 = vpop.f32.mrf.mxu0
    %v265 = vadd.f32 0.0, %v264
    %266 = vdwg.mxu0
    %v267 = vadd.f32 %v106, %v228
    %v268 = vadd.f32 %v107, %v230
    %v269 = vadd.f32 %v108, %v233
    %v270 = vadd.f32 %v109, %v235
    %v271 = vadd.f32 %v110, %v238
    %v272 = vadd.f32 %v111, %v240
    %v273 = vadd.f32 %v112, %v243
    %v274 = vadd.f32 %v113, %v245
    %v275 = vadd.f32 %v114, %v248
    %v276 = vadd.f32 %v115, %v250
    %v277 = vadd.f32 %v116, %v253
    %v278 = vadd.f32 %v117, %v255
    %v279 = vadd.f32 %v118, %v258
    %v280 = vadd.f32 %v119, %v260
    %v281 = vadd.f32 %v120, %v263
    %v282 = vadd.f32 %v121, %v265
    %vm283 = vcmask 261120
    %284 = vst.msk [vmem:[#allocation2] sm:$0xff] %vm283, %v267
    %285 = vst.msk [vmem:[#allocation2 + $0x8] sm:$0xff] %vm283, %v268
    %286 = vst.msk [vmem:[#allocation2 + $0x10] sm:$0xff] %vm283, %v269
    %287 = vst.msk [vmem:[#allocation2 + $0x18] sm:$0xff] %vm283, %v270
    %288 = vst.msk [vmem:[#allocation2 + $0x20] sm:$0xff] %vm283, %v271
    %289 = vst.msk [vmem:[#allocation2 + $0x28] sm:$0xff] %vm283, %v272
    %290 = vst.msk [vmem:[#allocation2 + $0x30] sm:$0xff] %vm283, %v273
    %291 = vst.msk [vmem:[#allocation2 + $0x38] sm:$0xff] %vm283, %v274
    %292 = vst.msk [vmem:[#allocation2 + $0x40] sm:$0xff] %vm283, %v275
    %293 = vst.msk [vmem:[#allocation2 + $0x48] sm:$0xff] %vm283, %v276
    %294 = vst.msk [vmem:[#allocation2 + $0x50] sm:$0xff] %vm283, %v277
    %295 = vst.msk [vmem:[#allocation2 + $0x58] sm:$0xff] %vm283, %v278
    %296 = vst.msk [vmem:[#allocation2 + $0x60] sm:$0xff] %vm283, %v279
    %297 = vst.msk [vmem:[#allocation2 + $0x68] sm:$0xff] %vm283, %v280
    %298 = vst.msk [vmem:[#allocation2 + $0x70] sm:$0xff] %vm283, %v281
    %299 = vst.msk [vmem:[#allocation2 + $0x78] sm:$0xff] %vm283, %v282
    %v300 = vld [vmem:[%s1] sm:$0xf]
    %v301 = vld [vmem:[%s1 + $0x4] sm:$0xf]
    %v302 = vld [vmem:[%s1 + $0x8] sm:$0xf]
    %v303 = vld [vmem:[%s1 + $0xc] sm:$0xf]
    %v304 = vld [vmem:[%s1 + $0x10] sm:$0xf]
    %v305 = vld [vmem:[%s1 + $0x14] sm:$0xf]
    %v306 = vld [vmem:[%s1 + $0x18] sm:$0xf]
    %v307 = vld [vmem:[%s1 + $0x1c] sm:$0xf]
    %v308 = vld [vmem:[%s1 + $0x20] sm:$0xf]
    %v309 = vld [vmem:[%s1 + $0x24] sm:$0xf]
    %v310 = vld [vmem:[%s1 + $0x28] sm:$0xf]
    %v311 = vld [vmem:[%s1 + $0x2c] sm:$0xf]
    %v312 = vld [vmem:[%s1 + $0x30] sm:$0xf]
    %v313 = vld [vmem:[%s1 + $0x34] sm:$0xf]
    %v314 = vld [vmem:[%s1 + $0x38] sm:$0xf]
    %v315 = vld [vmem:[%s1 + $0x3c] sm:$0xf]
    %316 = vxpose.xlu0.c.b16.start [1/8] %v154, 128
    %317 = vxpose.xlu0.c.b16.cont [2/8] %v155, 128
    %318 = vxpose.xlu0.c.b16.cont [3/8] %v156, 128
    %319 = vxpose.xlu0.c.b16.cont [4/8] %v157, 128
    %320 = vxpose.xlu0.c.b16.cont [5/8] %v158, 128
    %321 = vxpose.xlu0.c.b16.cont [6/8] %v159, 128
    %322 = vxpose.xlu0.c.b16.cont [7/8] %v160, 128
    %323 = vxpose.xlu0.c.b16.end [8/8] %v161, 128
    %v324 = vpop.trf.xlu0
    %v325 = vpop.trf.xlu0
    %v326 = vpop.trf.xlu0
    %v327 = vpop.trf.xlu0
    %v328 = vpop.trf.xlu0
    %v329 = vpop.trf.xlu0
    %v330 = vpop.trf.xlu0
    %v331 = vpop.trf.xlu0
    %v348 = vunpack.c.l.b16 %v300
    %v349 = vunpack.c.l.b16 %v301
    %v350 = vunpack.c.l.b16 %v302
    %v351 = vunpack.c.l.b16 %v303
    %v352 = vunpack.c.l.b16 %v304
    %v353 = vunpack.c.l.b16 %v305
    %v354 = vunpack.c.l.b16 %v306
    %v355 = vunpack.c.l.b16 %v307
    %v356 = vunpack.c.l.b16 %v308
    %v357 = vunpack.c.l.b16 %v309
    %v358 = vunpack.c.l.b16 %v310
    %v359 = vunpack.c.l.b16 %v311
    %v360 = vunpack.c.l.b16 %v312
    %v361 = vunpack.c.l.b16 %v313
    %v362 = vunpack.c.l.b16 %v314
    %v363 = vunpack.c.l.b16 %v315
    %v364 = vpack.c.b16 %v349, %v348
    %v365 = vpack.c.b16 %v351, %v350
    %v366 = vpack.c.b16 %v353, %v352
    %v367 = vpack.c.b16 %v355, %v354
    %v368 = vpack.c.b16 %v357, %v356
    %v369 = vpack.c.b16 %v359, %v358
    %v370 = vpack.c.b16 %v361, %v360
    %v371 = vpack.c.b16 %v363, %v362
    %380 = vmatpush.bf16.msra.mxu0 %v371
    %381 = vmatpush.bf16.msra.mxu0 %v370
    %382 = vmatpush.bf16.msra.mxu0 %v369
    %383 = vmatpush.bf16.msra.mxu0 %v368
    %384 = vmatpush.bf16.msra.mxu0 %v367
    %385 = vmatpush.bf16.msra.mxu0 %v366
    %386 = vmatpush.bf16.msra.mxu0 %v365
    %387 = vmatpush.bf16.msra.mxu0 %v364
    %388 = vmatmul.bf16.gmra.mxu0 %v324
    %v389 = vpop.f32.mrf.mxu0
    %v390 = vadd.f32 0.0, %v389
    %v391 = vpop.f32.mrf.mxu0
    %v392 = vadd.f32 0.0, %v391
    %393 = vmatmul.bf16.gmra.mxu0 %v325
    %v394 = vpop.f32.mrf.mxu0
    %v395 = vadd.f32 0.0, %v394
    %v396 = vpop.f32.mrf.mxu0
    %v397 = vadd.f32 0.0, %v396
    %398 = vmatmul.bf16.gmra.mxu0 %v326
    %v399 = vpop.f32.mrf.mxu0
    %v400 = vadd.f32 0.0, %v399
    %v401 = vpop.f32.mrf.mxu0
    %v402 = vadd.f32 0.0, %v401
    %403 = vmatmul.bf16.gmra.mxu0 %v327
    %v404 = vpop.f32.mrf.mxu0
    %v405 = vadd.f32 0.0, %v404
    %v406 = vpop.f32.mrf.mxu0
    %v407 = vadd.f32 0.0, %v406
    %408 = vmatmul.bf16.gmra.mxu0 %v328
    %v409 = vpop.f32.mrf.mxu0
    %v410 = vadd.f32 0.0, %v409
    %v411 = vpop.f32.mrf.mxu0
    %v412 = vadd.f32 0.0, %v411
    %413 = vmatmul.bf16.gmra.mxu0 %v329
    %v414 = vpop.f32.mrf.mxu0
    %v415 = vadd.f32 0.0, %v414
    %v416 = vpop.f32.mrf.mxu0
    %v417 = vadd.f32 0.0, %v416
    %418 = vmatmul.bf16.gmra.mxu0 %v330
    %v419 = vpop.f32.mrf.mxu0
    %v420 = vadd.f32 0.0, %v419
    %v421 = vpop.f32.mrf.mxu0
    %v422 = vadd.f32 0.0, %v421
    %423 = vmatmul.bf16.gmra.mxu0 %v331
    %v424 = vpop.f32.mrf.mxu0
    %v425 = vadd.f32 0.0, %v424
    %v426 = vpop.f32.mrf.mxu0
    %v427 = vadd.f32 0.0, %v426
    %428 = vdwg.mxu0
    %s429 = scalar_lea.vmem [#allocation4], %s85
    %v430 = vld [vmem:[%s429] sm:$0xff]
    %v431 = vld [vmem:[%s429 + $0x8] sm:$0xff]
    %v432 = vld [vmem:[%s429 + $0x10] sm:$0xff]
    %v433 = vld [vmem:[%s429 + $0x18] sm:$0xff]
    %v434 = vld [vmem:[%s429 + $0x20] sm:$0xff]
    %v435 = vld [vmem:[%s429 + $0x28] sm:$0xff]
    %v436 = vld [vmem:[%s429 + $0x30] sm:$0xff]
    %v437 = vld [vmem:[%s429 + $0x38] sm:$0xff]
    %v438 = vld [vmem:[%s429 + $0x40] sm:$0xff]
    %v439 = vld [vmem:[%s429 + $0x48] sm:$0xff]
    %v440 = vld [vmem:[%s429 + $0x50] sm:$0xff]
    %v441 = vld [vmem:[%s429 + $0x58] sm:$0xff]
    %v442 = vld [vmem:[%s429 + $0x60] sm:$0xff]
    %v443 = vld [vmem:[%s429 + $0x68] sm:$0xff]
    %v444 = vld [vmem:[%s429 + $0x70] sm:$0xff]
    %v445 = vld [vmem:[%s429 + $0x78] sm:$0xff]
    %v446 = vadd.f32 %v430, %v390
    %v447 = vadd.f32 %v431, %v392
    %v448 = vadd.f32 %v432, %v395
    %v449 = vadd.f32 %v433, %v397
    %v450 = vadd.f32 %v434, %v400
    %v451 = vadd.f32 %v435, %v402
    %v452 = vadd.f32 %v436, %v405
    %v453 = vadd.f32 %v437, %v407
    %v454 = vadd.f32 %v438, %v410
    %v455 = vadd.f32 %v439, %v412
    %v456 = vadd.f32 %v440, %v415
    %v457 = vadd.f32 %v441, %v417
    %v458 = vadd.f32 %v442, %v420
    %v459 = vadd.f32 %v443, %v422
    %v460 = vadd.f32 %v444, %v425
    %v461 = vadd.f32 %v445, %v427
    %462 = vst.msk [vmem:[%s429] sm:$0xff] %vm283, %v446
    %463 = vst.msk [vmem:[%s429 + $0x8] sm:$0xff] %vm283, %v447
    %464 = vst.msk [vmem:[%s429 + $0x10] sm:$0xff] %vm283, %v448
    %465 = vst.msk [vmem:[%s429 + $0x18] sm:$0xff] %vm283, %v449
    %466 = vst.msk [vmem:[%s429 + $0x20] sm:$0xff] %vm283, %v450
    %467 = vst.msk [vmem:[%s429 + $0x28] sm:$0xff] %vm283, %v451
    %468 = vst.msk [vmem:[%s429 + $0x30] sm:$0xff] %vm283, %v452
    %469 = vst.msk [vmem:[%s429 + $0x38] sm:$0xff] %vm283, %v453
    %470 = vst.msk [vmem:[%s429 + $0x40] sm:$0xff] %vm283, %v454
    %471 = vst.msk [vmem:[%s429 + $0x48] sm:$0xff] %vm283, %v455
    %472 = vst.msk [vmem:[%s429 + $0x50] sm:$0xff] %vm283, %v456
    %473 = vst.msk [vmem:[%s429 + $0x58] sm:$0xff] %vm283, %v457
    %474 = vst.msk [vmem:[%s429 + $0x60] sm:$0xff] %vm283, %v458
    %475 = vst.msk [vmem:[%s429 + $0x68] sm:$0xff] %vm283, %v459
    %476 = vst.msk [vmem:[%s429 + $0x70] sm:$0xff] %vm283, %v460
    %477 = vst.msk [vmem:[%s429 + $0x78] sm:$0xff] %vm283, %v461
    // Predicated region
    $region30: #{gccf_forward.3} parent=1 // pred_check
      %p478 = pneg %p27
    $region31: #{gccf_forward.3} parent=1 // pred_check_branch
      %480 = sbr.rel (%p478) target = $region33
    $region32: #{gccf_forward.3} parent=1 // pred_region
      %v481 = vld [vmem:[#allocation2] sm:$0xff]
      %v482 = vld [vmem:[#allocation2 + $0x8] sm:$0xff]
      %v483 = vld [vmem:[#allocation2 + $0x10] sm:$0xff]
      %v484 = vld [vmem:[#allocation2 + $0x18] sm:$0xff]
      %v485 = vld [vmem:[#allocation2 + $0x20] sm:$0xff]
      %v486 = vld [vmem:[#allocation2 + $0x28] sm:$0xff]
      %v487 = vld [vmem:[#allocation2 + $0x30] sm:$0xff]
      %v488 = vld [vmem:[#allocation2 + $0x38] sm:$0xff]
      %v489 = vld [vmem:[#allocation2 + $0x40] sm:$0xff]
      %v490 = vld [vmem:[#allocation2 + $0x48] sm:$0xff]
      %v491 = vld [vmem:[#allocation2 + $0x50] sm:$0xff]
      %v492 = vld [vmem:[#allocation2 + $0x58] sm:$0xff]
      %v493 = vld [vmem:[#allocation2 + $0x60] sm:$0xff]
      %v494 = vld [vmem:[#allocation2 + $0x68] sm:$0xff]
      %v495 = vld [vmem:[#allocation2 + $0x70] sm:$0xff]
      %v496 = vld [vmem:[#allocation2 + $0x78] sm:$0xff]
      %v497 = vmax.f32 %v481, 0.0
      %v498 = vmax.f32 %v482, 0.0
      %v499 = vmax.f32 %v483, 0.0
      %v500 = vmax.f32 %v484, 0.0
      %v501 = vmax.f32 %v485, 0.0
      %v502 = vmax.f32 %v486, 0.0
      %v503 = vmax.f32 %v487, 0.0
      %v504 = vmax.f32 %v488, 0.0
      %v505 = vmax.f32 %v489, 0.0
      %v506 = vmax.f32 %v490, 0.0
      %v507 = vmax.f32 %v491, 0.0
      %v508 = vmax.f32 %v492, 0.0
      %v509 = vmax.f32 %v493, 0.0
      %v510 = vmax.f32 %v494, 0.0
      %v511 = vmax.f32 %v495, 0.0
      %v512 = vmax.f32 %v496, 0.0
      %513 = vst.msk [vmem:[#allocation2] sm:$0xff] %vm283, %v497
      %514 = vst.msk [vmem:[#allocation2 + $0x8] sm:$0xff] %vm283, %v498
      %515 = vst.msk [vmem:[#allocation2 + $0x10] sm:$0xff] %vm283, %v499
      %516 = vst.msk [vmem:[#allocation2 + $0x18] sm:$0xff] %vm283, %v500
      %517 = vst.msk [vmem:[#allocation2 + $0x20] sm:$0xff] %vm283, %v501
      %518 = vst.msk [vmem:[#allocation2 + $0x28] sm:$0xff] %vm283, %v502
      %519 = vst.msk [vmem:[#allocation2 + $0x30] sm:$0xff] %vm283, %v503
      %520 = vst.msk [vmem:[#allocation2 + $0x38] sm:$0xff] %vm283, %v504
      %521 = vst.msk [vmem:[#allocation2 + $0x40] sm:$0xff] %vm283, %v505
      %522 = vst.msk [vmem:[#allocation2 + $0x48] sm:$0xff] %vm283, %v506
      %523 = vst.msk [vmem:[#allocation2 + $0x50] sm:$0xff] %vm283, %v507
      %524 = vst.msk [vmem:[#allocation2 + $0x58] sm:$0xff] %vm283, %v508
      %525 = vst.msk [vmem:[#allocation2 + $0x60] sm:$0xff] %vm283, %v509
      %526 = vst.msk [vmem:[#allocation2 + $0x68] sm:$0xff] %vm283, %v510
      %527 = vst.msk [vmem:[#allocation2 + $0x70] sm:$0xff] %vm283, %v511
      %528 = vst.msk [vmem:[#allocation2 + $0x78] sm:$0xff] %vm283, %v512
      %v529 = vld [vmem:[%s3] sm:$0xff]
      %v530 = vld [vmem:[%s3 + $0x8] sm:$0xff]
      %v531 = vld [vmem:[%s3 + $0x10] sm:$0xff]
      %v532 = vld [vmem:[%s3 + $0x18] sm:$0xff]
      %v533 = vld [vmem:[%s3 + $0x20] sm:$0xff]
      %v534 = vld [vmem:[%s3 + $0x28] sm:$0xff]
      %v535 = vld [vmem:[%s3 + $0x30] sm:$0xff]
      %v536 = vld [vmem:[%s3 + $0x38] sm:$0xff]
      %v537 = vld [vmem:[%s3 + $0x40] sm:$0xff]
      %v538 = vld [vmem:[%s3 + $0x48] sm:$0xff]
      %v539 = vld [vmem:[%s3 + $0x50] sm:$0xff]
      %v540 = vld [vmem:[%s3 + $0x58] sm:$0xff]
      %v541 = vld [vmem:[%s3 + $0x60] sm:$0xff]
      %v542 = vld [vmem:[%s3 + $0x68] sm:$0xff]
      %v543 = vld [vmem:[%s3 + $0x70] sm:$0xff]
      %v544 = vld [vmem:[%s3 + $0x78] sm:$0xff]
      %v545 = vadd.f32 %v529, %v497
      %v546 = vadd.f32 %v530, %v498
      %v547 = vadd.f32 %v531, %v499
      %v548 = vadd.f32 %v532, %v500
      %v549 = vadd.f32 %v533, %v501
      %v550 = vadd.f32 %v534, %v502
      %v551 = vadd.f32 %v535, %v503
      %v552 = vadd.f32 %v536, %v504
      %v553 = vadd.f32 %v537, %v505
      %v554 = vadd.f32 %v538, %v506
      %v555 = vadd.f32 %v539, %v507
      %v556 = vadd.f32 %v540, %v508
      %v557 = vadd.f32 %v541, %v509
      %v558 = vadd.f32 %v542, %v510
      %v559 = vadd.f32 %v543, %v511
      %v560 = vadd.f32 %v544, %v512
      %v561 = vmul.f32 %v545, 0.33333334
      %v562 = vmul.f32 %v546, 0.33333334
      %v563 = vmul.f32 %v547, 0.33333334
      %v564 = vmul.f32 %v548, 0.33333334
      %v565 = vmul.f32 %v549, 0.33333334
      %v566 = vmul.f32 %v550, 0.33333334
      %v567 = vmul.f32 %v551, 0.33333334
      %v568 = vmul.f32 %v552, 0.33333334
      %v569 = vmul.f32 %v553, 0.33333334
      %v570 = vmul.f32 %v554, 0.33333334
      %v571 = vmul.f32 %v555, 0.33333334
      %v572 = vmul.f32 %v556, 0.33333334
      %v573 = vmul.f32 %v557, 0.33333334
      %v574 = vmul.f32 %v558, 0.33333334
      %v575 = vmul.f32 %v559, 0.33333334
      %v576 = vmul.f32 %v560, 0.33333334
      %577 = vst.msk [vmem:[%s6] sm:$0xff] %vm283, %v561
      %578 = vst.msk [vmem:[%s6 + $0x8] sm:$0xff] %vm283, %v562
      %579 = vst.msk [vmem:[%s6 + $0x10] sm:$0xff] %vm283, %v563
      %580 = vst.msk [vmem:[%s6 + $0x18] sm:$0xff] %vm283, %v564
      %581 = vst.msk [vmem:[%s6 + $0x20] sm:$0xff] %vm283, %v565
      %582 = vst.msk [vmem:[%s6 + $0x28] sm:$0xff] %vm283, %v566
      %583 = vst.msk [vmem:[%s6 + $0x30] sm:$0xff] %vm283, %v567
      %584 = vst.msk [vmem:[%s6 + $0x38] sm:$0xff] %vm283, %v568
      %585 = vst.msk [vmem:[%s6 + $0x40] sm:$0xff] %vm283, %v569
      %586 = vst.msk [vmem:[%s6 + $0x48] sm:$0xff] %vm283, %v570
      %587 = vst.msk [vmem:[%s6 + $0x50] sm:$0xff] %vm283, %v571
      %588 = vst.msk [vmem:[%s6 + $0x58] sm:$0xff] %vm283, %v572
      %589 = vst.msk [vmem:[%s6 + $0x60] sm:$0xff] %vm283, %v573
      %590 = vst.msk [vmem:[%s6 + $0x68] sm:$0xff] %vm283, %v574
      %591 = vst.msk [vmem:[%s6 + $0x70] sm:$0xff] %vm283, %v575
      %592 = vst.msk [vmem:[%s6 + $0x78] sm:$0xff] %vm283, %v576
    $region33: #{gccf_forward.3} parent=1 // pred_fallthru
      _
    // Predicated region
    $region34: #{gccf_forward.3} parent=1 // pred_check
      _
    $region35: #{gccf_forward.3} parent=1 // pred_check_branch
      %594 = sbr.rel (%p28) target = $region37
    $region36: #{gccf_forward.3} parent=1 // pred_region
      %v595 = vld [vmem:[#allocation4] sm:$0xff]
      %v596 = vld [vmem:[#allocation4 + $0x8] sm:$0xff]
      %v597 = vld [vmem:[#allocation4 + $0x10] sm:$0xff]
      %v598 = vld [vmem:[#allocation4 + $0x18] sm:$0xff]
      %v599 = vld [vmem:[#allocation4 + $0x20] sm:$0xff]
      %v600 = vld [vmem:[#allocation4 + $0x28] sm:$0xff]
      %v601 = vld [vmem:[#allocation4 + $0x30] sm:$0xff]
      %v602 = vld [vmem:[#allocation4 + $0x38] sm:$0xff]
      %v603 = vld [vmem:[#allocation4 + $0x40] sm:$0xff]
      %v604 = vld [vmem:[#allocation4 + $0x48] sm:$0xff]
      %v605 = vld [vmem:[#allocation4 + $0x50] sm:$0xff]
      %v606 = vld [vmem:[#allocation4 + $0x58] sm:$0xff]
      %v607 = vld [vmem:[#allocation4 + $0x60] sm:$0xff]
      %v608 = vld [vmem:[#allocation4 + $0x68] sm:$0xff]
      %v609 = vld [vmem:[#allocation4 + $0x70] sm:$0xff]
      %v610 = vld [vmem:[#allocation4 + $0x78] sm:$0xff]
      %v611 = vmax.f32 %v595, 0.0
      %v612 = vmax.f32 %v596, 0.0
      %v613 = vmax.f32 %v597, 0.0
      %v614 = vmax.f32 %v598, 0.0
      %v615 = vmax.f32 %v599, 0.0
      %v616 = vmax.f32 %v600, 0.0
      %v617 = vmax.f32 %v601, 0.0
      %v618 = vmax.f32 %v602, 0.0
      %v619 = vmax.f32 %v603, 0.0
      %v620 = vmax.f32 %v604, 0.0
      %v621 = vmax.f32 %v605, 0.0
      %v622 = vmax.f32 %v606, 0.0
      %v623 = vmax.f32 %v607, 0.0
      %v624 = vmax.f32 %v608, 0.0
      %v625 = vmax.f32 %v609, 0.0
      %v626 = vmax.f32 %v610, 0.0
      %627 = vst.msk [vmem:[#allocation4] sm:$0xff] %vm283, %v611
      %628 = vst.msk [vmem:[#allocation4 + $0x8] sm:$0xff] %vm283, %v612
      %629 = vst.msk [vmem:[#allocation4 + $0x10] sm:$0xff] %vm283, %v613
      %630 = vst.msk [vmem:[#allocation4 + $0x18] sm:$0xff] %vm283, %v614
      %631 = vst.msk [vmem:[#allocation4 + $0x20] sm:$0xff] %vm283, %v615
      %632 = vst.msk [vmem:[#allocation4 + $0x28] sm:$0xff] %vm283, %v616
      %633 = vst.msk [vmem:[#allocation4 + $0x30] sm:$0xff] %vm283, %v617
      %634 = vst.msk [vmem:[#allocation4 + $0x38] sm:$0xff] %vm283, %v618
      %635 = vst.msk [vmem:[#allocation4 + $0x40] sm:$0xff] %vm283, %v619
      %636 = vst.msk [vmem:[#allocation4 + $0x48] sm:$0xff] %vm283, %v620
      %637 = vst.msk [vmem:[#allocation4 + $0x50] sm:$0xff] %vm283, %v621
      %638 = vst.msk [vmem:[#allocation4 + $0x58] sm:$0xff] %vm283, %v622
      %639 = vst.msk [vmem:[#allocation4 + $0x60] sm:$0xff] %vm283, %v623
      %640 = vst.msk [vmem:[#allocation4 + $0x68] sm:$0xff] %vm283, %v624
      %641 = vst.msk [vmem:[#allocation4 + $0x70] sm:$0xff] %vm283, %v625
      %642 = vst.msk [vmem:[#allocation4 + $0x78] sm:$0xff] %vm283, %v626
      %v643 = vld [vmem:[%s4] sm:$0xff]
      %v644 = vld [vmem:[%s4 + $0x8] sm:$0xff]
      %v645 = vld [vmem:[%s4 + $0x10] sm:$0xff]
      %v646 = vld [vmem:[%s4 + $0x18] sm:$0xff]
      %v647 = vld [vmem:[%s4 + $0x20] sm:$0xff]
      %v648 = vld [vmem:[%s4 + $0x28] sm:$0xff]
      %v649 = vld [vmem:[%s4 + $0x30] sm:$0xff]
      %v650 = vld [vmem:[%s4 + $0x38] sm:$0xff]
      %v651 = vld [vmem:[%s4 + $0x40] sm:$0xff]
      %v652 = vld [vmem:[%s4 + $0x48] sm:$0xff]
      %v653 = vld [vmem:[%s4 + $0x50] sm:$0xff]
      %v654 = vld [vmem:[%s4 + $0x58] sm:$0xff]
      %v655 = vld [vmem:[%s4 + $0x60] sm:$0xff]
      %v656 = vld [vmem:[%s4 + $0x68] sm:$0xff]
      %v657 = vld [vmem:[%s4 + $0x70] sm:$0xff]
      %v658 = vld [vmem:[%s4 + $0x78] sm:$0xff]
      %v659 = vadd.f32 %v643, %v611
      %v660 = vadd.f32 %v644, %v612
      %v661 = vadd.f32 %v645, %v613
      %v662 = vadd.f32 %v646, %v614
      %v663 = vadd.f32 %v647, %v615
      %v664 = vadd.f32 %v648, %v616
      %v665 = vadd.f32 %v649, %v617
      %v666 = vadd.f32 %v650, %v618
      %v667 = vadd.f32 %v651, %v619
      %v668 = vadd.f32 %v652, %v620
      %v669 = vadd.f32 %v653, %v621
      %v670 = vadd.f32 %v654, %v622
      %v671 = vadd.f32 %v655, %v623
      %v672 = vadd.f32 %v656, %v624
      %v673 = vadd.f32 %v657, %v625
      %v674 = vadd.f32 %v658, %v626
      %v675 = vmul.f32 %v659, 0.33333334
      %v676 = vmul.f32 %v660, 0.33333334
      %v677 = vmul.f32 %v661, 0.33333334
      %v678 = vmul.f32 %v662, 0.33333334
      %v679 = vmul.f32 %v663, 0.33333334
      %v680 = vmul.f32 %v664, 0.33333334
      %v681 = vmul.f32 %v665, 0.33333334
      %v682 = vmul.f32 %v666, 0.33333334
      %v683 = vmul.f32 %v667, 0.33333334
      %v684 = vmul.f32 %v668, 0.33333334
      %v685 = vmul.f32 %v669, 0.33333334
      %v686 = vmul.f32 %v670, 0.33333334
      %v687 = vmul.f32 %v671, 0.33333334
      %v688 = vmul.f32 %v672, 0.33333334
      %v689 = vmul.f32 %v673, 0.33333334
      %v690 = vmul.f32 %v674, 0.33333334
      %691 = vst.msk [vmem:[%s8] sm:$0xff] %vm283, %v675
      %692 = vst.msk [vmem:[%s8 + $0x8] sm:$0xff] %vm283, %v676
      %693 = vst.msk [vmem:[%s8 + $0x10] sm:$0xff] %vm283, %v677
      %694 = vst.msk [vmem:[%s8 + $0x18] sm:$0xff] %vm283, %v678
      %695 = vst.msk [vmem:[%s8 + $0x20] sm:$0xff] %vm283, %v679
      %696 = vst.msk [vmem:[%s8 + $0x28] sm:$0xff] %vm283, %v680
      %697 = vst.msk [vmem:[%s8 + $0x30] sm:$0xff] %vm283, %v681
      %698 = vst.msk [vmem:[%s8 + $0x38] sm:$0xff] %vm283, %v682
      %699 = vst.msk [vmem:[%s8 + $0x40] sm:$0xff] %vm283, %v683
      %700 = vst.msk [vmem:[%s8 + $0x48] sm:$0xff] %vm283, %v684
      %701 = vst.msk [vmem:[%s8 + $0x50] sm:$0xff] %vm283, %v685
      %702 = vst.msk [vmem:[%s8 + $0x58] sm:$0xff] %vm283, %v686
      %703 = vst.msk [vmem:[%s8 + $0x60] sm:$0xff] %vm283, %v687
      %704 = vst.msk [vmem:[%s8 + $0x68] sm:$0xff] %vm283, %v688
      %705 = vst.msk [vmem:[%s8 + $0x70] sm:$0xff] %vm283, %v689
      %706 = vst.msk [vmem:[%s8 + $0x78] sm:$0xff] %vm283, %v690
    $region37: #{gccf_forward.3} parent=1 // pred_fallthru
      _
    // Predicated region
    $region38: #{gccf_forward.3} parent=1 // pred_check
      _
    $region39: #{gccf_forward.3} parent=1 // pred_check_branch
      %708 = sbr.rel (0) target = $region41
    $region40: #{gccf_forward.3} parent=1 // pred_region
      %710 = vsyncadd [#allocation3], 0
      %s711 = sshll.u32 [#allocation2], 4
      %s712 = int_to_ptr.vmem [resolvable:$true] %s711
      %s713 = sshll.u32 %s5, 4
      %s714 = int_to_ptr.hbm [resolvable:$true] %s713
      %719 = dma.vmem_to_hbm [thread:$0]  %s712, 2048, %s714, [#allocation3], 128, 128, 8
    $region41: #{gccf_forward.3} parent=1 // pred_fallthru
      _
    // Predicated region
    $region42: #{gccf_forward.3} parent=1 // pred_check
      _
    $region43: #{gccf_forward.3} parent=1 // pred_check_branch
      %721 = sbr.rel (0) target = $region45
    $region44: #{gccf_forward.3} parent=1 // pred_region
      _
    $region45: #{gccf_forward.3} parent=1 // pred_fallthru
      _
    // Predicated region
    $region46: #{gccf_forward.3} parent=1 // pred_check
      _
    $region47: #{gccf_forward.3} parent=1 // pred_check_branch
      %723 = sbr.rel (0) target = $region49
    $region48: #{gccf_forward.3} parent=1 // pred_region
      %725 = vsyncadd [#allocation5], 0
      %s726 = sshll.u32 [#allocation4], 4
      %s727 = int_to_ptr.vmem [resolvable:$true] %s726
      %s728 = sshll.u32 %s7, 4
      %s729 = int_to_ptr.hbm [resolvable:$true] %s728
      %734 = dma.vmem_to_hbm [thread:$0]  %s727, 2048, %s729, [#allocation5], 128, 128, 8
    $region49: #{gccf_forward.3} parent=1 // pred_fallthru
      _
    // Predicated region
    $region50: #{gccf_forward.3} parent=1 // pred_check
      _
    $region51: #{gccf_forward.3} parent=1 // pred_check_branch
      %736 = sbr.rel (0) target = $region53
    $region52: #{gccf_forward.3} parent=1 // pred_region
      _
    $region53: #{gccf_forward.3} parent=1 // pred_fallthru
      _
    // Predicated region
    $region54: #{gccf_forward.3} parent=1 // pred_check
      _
    $region55: #{gccf_forward.3} parent=1 // pred_check_branch
      %738 = sbr.rel (0) target = $region57
    $region56: #{gccf_forward.3} parent=1 // pred_region
      %740 = dma.done [#allocation3], 2048
    $region57: #{gccf_forward.3} parent=1 // pred_fallthru
      _
    // Predicated region
    $region58: #{gccf_forward.3} parent=1 // pred_check
      _
    $region59: #{gccf_forward.3} parent=1 // pred_check_branch
      %742 = sbr.rel (0) target = $region61
    $region60: #{gccf_forward.3} parent=1 // pred_region
      _
    $region61: #{gccf_forward.3} parent=1 // pred_fallthru
      _
    // Predicated region
    $region62: #{gccf_forward.3} parent=1 // pred_check
      _
    $region63: #{gccf_forward.3} parent=1 // pred_check_branch
      %744 = sbr.rel (0) target = $region65
    $region64: #{gccf_forward.3} parent=1 // pred_region
      %746 = dma.done [#allocation5], 2048
    $region65: #{gccf_forward.3} parent=1 // pred_fallthru
      _
    // Predicated region
    $region66: #{gccf_forward.3} parent=1 // pred_check
      _
    $region67: #{gccf_forward.3} parent=1 // pred_check_branch
      %748 = sbr.rel (0) target = $region69
    $region68: #{gccf_forward.3} parent=1 // pred_region
      _
    $region69: #{gccf_forward.3} parent=1 // pred_fallthru
      _
    %749 = vsyncpa [#allocation3], 1
    %750 = vsyncpa [#allocation5], 1

</llo_original>
